<compile_context>
chip_gen: v6e
topology: v6e:2x2x1
jax: 0.10.0
libtpu: 0.0.40
codegen_flags: <defaults>
</compile_context>

<pallas_src>
import jax
import jax.numpy as jnp
from jax import lax
from jax.experimental import pallas as pl
from jax.experimental.pallas import tpu as pltpu


def _distill_kernel(s1_ref, s2_ref, m1s_ref, m2_ref,
                    wet_ref, w1t_ref, b1_ref, w2t_ref, b2_ref,
                    o1_ref, o2_ref, ns_ref,
                    s1p_scr, d1_scr, d2_scr):
    R, D = s1_ref.shape                      # R = Bt * L rows (bf16 inputs)
    Bt, L, _ = m1s_ref.shape
    f32, bf16 = jnp.float32, jnp.bfloat16

    NT = (((1,), (1,)), ((), ()))            # A @ B.T   (contract last dims)
    TN = (((0,), (0,)), ((), ()))            # A.T @ B   (contract first dims)

    # para_attention projection on all rows at once: (R, D) @ (D, D) on the
    # MXU (weight pre-transposed on the host), f32 accumulation into scratch.
    s1p_scr[...] = jnp.dot(s1_ref[...], wet_ref[...], preferred_element_type=f32)

    def per_batch(b, r0):
        s1p_b_f32 = s1p_scr[pl.ds(r0, L), :]            # (L, D) f32
        s1p_b = s1p_b_f32.astype(bf16)
        s2_b = s2_ref[pl.ds(r0, L), :]                   # (L, D) bf16

        # e = s1p @ s2^T  (NT matmul, f32 accumulation)
        e = lax.dot_general(s1p_b, s2_b, NT, preferred_element_type=f32)
        # Exact mask add: (1e5*m1)*m2 - 1e5 == -1e5*(1 - m1*m2)  (3 VPU ops).
        a1 = m1s_ref[b]                                  # (L, 1) = 1e5 * mask1
        m2 = m2_ref[b]                                   # (1, L) = mask2
        e = e + (a1 * m2 - 100000.0)

        # alpha2 = softmax(e, axis=-1)   (row softmax)
        p_row = jnp.exp(e - jnp.max(e, axis=-1, keepdims=True))
        alpha2 = p_row * pl.reciprocal(
            jnp.sum(p_row, axis=-1, keepdims=True), approx=True)

        # alpha1 = softmax(e^T, axis=-1) kept in column layout:
        #   alpha1_col[i, j] == alpha1[j, i]    (no (L, L) transpose)
        p_col = jnp.exp(e - jnp.max(e, axis=0, keepdims=True))
        alpha1_col = p_col * pl.reciprocal(
            jnp.sum(p_col, axis=0, keepdims=True), approx=True)

        x1 = jnp.dot(alpha2.astype(bf16), s2_b, preferred_element_type=f32)
        x2 = lax.dot_general(alpha1_col.astype(bf16), s1p_b, TN,
                             preferred_element_type=f32)

        d1_scr[pl.ds(r0, L), :] = s1p_b_f32 - x1
        d2_scr[pl.ds(r0, L), :] = s2_b.astype(f32) - x2

    if Bt == 1:
        per_batch(0, 0)
    else:
        def body(b, carry):
            per_batch(b, pl.multiple_of(b * L, L))
            return carry
        lax.fori_loop(0, Bt, body, 0)

    # para_distill linears on the flattened residuals (pre-transposed bf16
    # weights), then sigmoid — all rows of the block at once.
    d1 = jnp.dot(d1_scr[...].astype(bf16), w1t_ref[...],
                 preferred_element_type=f32) + b1_ref[...]
    d2 = jnp.dot(d2_scr[...].astype(bf16), w2t_ref[...],
                 preferred_element_type=f32) + b2_ref[...]
    d1 = jax.nn.sigmoid(d1)
    d2 = jax.nn.sigmoid(d2)

    o1_ref[...] = (s1p_scr[...] * (1.0 - d1)).astype(o1_ref.dtype)
    o2_ref[...] = (s2_ref[...].astype(f32) * (1.0 - d2)).astype(o2_ref.dtype)

    # Lane-dense partial sums: lane 0 -> sum|d1|, lane 1 -> sum|d2|, rest 0.
    lane = lax.broadcasted_iota(jnp.int32, (1, 1, 128), 2)
    sum1 = jnp.sum(jnp.abs(d1))
    sum2 = jnp.sum(jnp.abs(d2))
    ns_ref[...] = jnp.where(lane == 0, sum1, jnp.where(lane == 1, sum2, 0.0))


def _tpu_vmem_capacity_bytes():
    """Generation-aware VMEM capacity; conservative (v7x, 64 MiB) fallback."""
    try:
        info = pltpu.get_tpu_info()
        cap = getattr(info, "vmem_capacity_bytes", None)
        if cap:
            return int(cap)
    except Exception:
        pass
    return 64 * 1024 * 1024


def _vmem_need(bt, L, D, out_bytes):
    """Approximate VMEM requirement for a (bt*L, D) block."""
    rows = bt * L
    # Pipelined I/O blocks are double-buffered: s1+s2 bf16, o1+o2 out_dtype, masks.
    io = 2 * (rows * D * (2 + 2) + 2 * rows * D * out_bytes + 2 * bt * L * 4) + 4096
    # Weights/biases are single-buffered (memory_space=VMEM, fully resident).
    wts = 3 * D * D * 2 + 2 * D * 4
    scratch = 3 * rows * D * 4                 # s1p, d1, d2 f32 scratch
    live = 6 * L * L * 4 + 4 * rows * D * 4    # (L,L) temps + tail f32 values
    return io + wts + scratch + live


def _pick_block_batch(B, L, D, out_bytes):
    """Batches per grid step: big enough rows for the MXU, bounded by a
    generation-aware VMEM budget, >= 2 grid steps (and an even grid on the
    2-TensorCore / 64 MiB v7x parts) whenever possible."""
    if L % 8 != 0:
        return 1                    # keep the (bt*L, D) row blocks sublane-aligned
    vmem_cap = _tpu_vmem_capacity_bytes()
    small_vmem = vmem_cap <= (96 << 20)          # v7x-class (64 MiB / TensorCore)
    budget = (24 << 20) if small_vmem else (64 << 20)
    min_steps = 2 if B >= 2 else 1

    feasible = [bt for bt in range(1, B + 1)
                if B % bt == 0 and (B // bt) >= min_steps
                and _vmem_need(bt, L, D, out_bytes) <= budget]
    if not feasible:
        return 1
    if small_vmem:
        # Prefer an even number of grid steps: dimension_semantics=("parallel",)
        # shards the grid across v7x's 2 TensorCores.
        even = [bt for bt in feasible if (B // bt) % 2 == 0]
        if even:
            feasible = even
    rows_target = 256               # tall enough tiles for the 256-wide MXU
    for bt in feasible:
        if bt * L >= rows_target:
            return bt
    return feasible[-1]


def distill_forward(s1, s2, params, mask1=None, mask2=None,
                    block_batch=None, out_dtype=jnp.bfloat16):
    """Pallas equivalent of DistillModule.forward (para_attention=para_distill=True).

    o1/o2 are emitted in `out_dtype` (bf16 by default, pass jnp.float32 if the
    consumer needs full precision)."""
    B, L, D = s1.shape
    we, w1, b1, w2, b2 = params
    f32, bf16 = jnp.float32, jnp.bfloat16

    if mask1 is None:
        mask1 = jnp.ones((B, L), dtype=f32)
    if mask2 is None:
        mask2 = jnp.ones((B, L), dtype=f32)

    # bf16 operands for the MXU; host-side flattening so the kernel never
    # reshapes.  mask1 is pre-scaled by 1e5 for the exact 3-op mask add.
    s1_flat = s1.astype(bf16).reshape(B * L, D)
    s2_flat = s2.astype(bf16).reshape(B * L, D)
    m1s = (100000.0 * mask1.astype(f32)).reshape(B, L, 1)
    m2 = mask2.astype(f32).reshape(B, 1, L)
    # PyTorch nn.Linear stores (out, in) and computes y = x @ W.T + b;
    # pre-transpose once on the host so the kernel does plain x @ W.
    wet = we.T.astype(bf16)
    w1t = w1.T.astype(bf16)
    w2t = w2.T.astype(bf16)
    b1_2d = b1.reshape(1, D).astype(f32)
    b2_2d = b2.reshape(1, D).astype(f32)

    out_bytes = jnp.dtype(out_dtype).itemsize
    Bt = block_batch if block_batch is not None else _pick_block_batch(B, L, D, out_bytes)
    assert B % Bt == 0
    num_blocks = B // Bt
    R = Bt * L

    # VMEM limit derived from the actual block size (guarded for explicit
    # block_batch overrides), clamped below physical capacity.
    vmem_cap = _tpu_vmem_capacity_bytes()
    hard_cap = (vmem_cap * 3) // 4
    need = _vmem_need(Bt, L, D, out_bytes)
    if block_batch is not None and need > hard_cap:
        raise ValueError(
            f"block_batch={block_batch} needs ~{need>>20} MiB VMEM "
            f"(> {hard_cap>>20} MiB available); pick a smaller block_batch.")
    vmem_limit = int(min(hard_cap, max(32 << 20, 2 * need)))

    out_shapes = (
        jax.ShapeDtypeStruct((B * L, D), out_dtype),              # o1 (flat)
        jax.ShapeDtypeStruct((B * L, D), out_dtype),              # o2 (flat)
        jax.ShapeDtypeStruct((num_blocks, 1, 128), jnp.float32),  # [sum|d1|, sum|d2|, 0...]
    )

    weight_spec = pl.BlockSpec(memory_space=pltpu.MemorySpace.VMEM)  # single-buffered, resident

    grid_spec = pltpu.PrefetchScalarGridSpec(
        num_scalar_prefetch=0,
        grid=(num_blocks,),
        in_specs=[
            pl.BlockSpec((R, D), lambda g: (g, 0)),        # s1 (bf16, flat rows)
            pl.BlockSpec((R, D), lambda g: (g, 0)),        # s2 (bf16, flat rows)
            pl.BlockSpec((Bt, L, 1), lambda g: (g, 0, 0)), # 1e5 * mask1
            pl.BlockSpec((Bt, 1, L), lambda g: (g, 0, 0)), # mask2
            weight_spec,                                   # We^T (bf16)
            weight_spec,                                   # W1^T (bf16)
            weight_spec,                                   # b1
            weight_spec,                                   # W2^T (bf16)
            weight_spec,                                   # b2
        ],
        out_specs=[
            pl.BlockSpec((R, D), lambda g: (g, 0)),
            pl.BlockSpec((R, D), lambda g: (g, 0)),
            pl.BlockSpec((1, 1, 128), lambda g: (g, 0, 0)),
        ],
        scratch_shapes=[
            pltpu.VMEM((R, D), jnp.float32),   # s1p  (projected s1, f32)
            pltpu.VMEM((R, D), jnp.float32),   # d1 residuals
            pltpu.VMEM((R, D), jnp.float32),   # d2 residuals
        ],
    )

    # Advisory cost estimate so XLA schedules surrounding glue well.
    flops = 2 * B * L * D * (3 * D + 3 * L)
    transcendentals = B * (2 * L * L + 2 * L * D + 4 * L)
    bytes_accessed = (B * L * D * (2 + 2 + 2 * out_bytes) + 4 * B * L * 4
                      + 3 * D * D * 2 + 2 * D * 4 + num_blocks * 128 * 4)

    o1_flat, o2_flat, nsums = pl.pallas_call(
        _distill_kernel,
        out_shape=out_shapes,
        grid_spec=grid_spec,
        compiler_params=pltpu.CompilerParams(
            dimension_semantics=("parallel",),
            vmem_limit_bytes=vmem_limit,
        ),
        cost_estimate=pl.CostEstimate(flops=flops,
                                      transcendentals=transcendentals,
                                      bytes_accessed=bytes_accessed),
    )(s1_flat, s2_flat, m1s, m2, wet, w1t, b1_2d, w2t, b2_2d)

    o1 = o1_flat.reshape(B, L, D)
    o2 = o2_flat.reshape(B, L, D)
    denom = float(B * L * D)
    n1 = jnp.sum(nsums[:, 0, 0]) / denom
    n2 = jnp.sum(nsums[:, 0, 1]) / denom
    return o1, o2, n1, n2


def distill_reference(s1, s2, params, mask1=None, mask2=None):
    """Pure-JAX reference mirroring the kernel's mixed-precision contract
    (bf16 MXU operands, f32 accumulation / mask / softmax / sigmoid)."""
    we, w1, b1, w2, b2 = params
    f32, bf16 = jnp.float32, jnp.bfloat16
    B, L, D = s1.shape
    if mask1 is None:
        mask1 = jnp.ones((B, L), f32)
    if mask2 is None:
        mask2 = jnp.ones((B, L), f32)
    s1b = s1.astype(bf16)
    s2b = s2.astype(bf16)
    s1p = jnp.einsum("bld,ed->ble", s1b, we.astype(bf16), preferred_element_type=f32)
    e = jnp.einsum("bld,bmd->blm", s1p.astype(bf16), s2b, preferred_element_type=f32)
    m1 = mask1.astype(f32)[:, :, None]
    m2 = mask2.astype(f32)[:, None, :]
    e = e + (-100000.0) * (1.0 - m1 * m2)
    alpha2 = jax.nn.softmax(e, axis=-1)
    alpha1 = jax.nn.softmax(jnp.swapaxes(e, -1, -2), axis=-1)
    x1 = jnp.einsum("blm,bmd->bld", alpha2.astype(bf16), s2b, preferred_element_type=f32)
    x2 = jnp.einsum("blm,bmd->bld", alpha1.astype(bf16), s1p.astype(bf16),
                    preferred_element_type=f32)
    d1 = jax.nn.sigmoid(jnp.einsum("bld,ed->ble", (s1p - x1).astype(bf16),
                                   w1.astype(bf16), preferred_element_type=f32) + b1)
    d2 = jax.nn.sigmoid(jnp.einsum("bld,ed->ble", (s2b.astype(f32) - x2).astype(bf16),
                                   w2.astype(bf16), preferred_element_type=f32) + b2)
    o1 = s1p * (1.0 - d1)
    o2 = s2b.astype(f32) * (1.0 - d2)
    return o1, o2, jnp.mean(jnp.abs(d1)), jnp.mean(jnp.abs(d2))


def _check(name, got, want, atol=5e-3, rtol=5e-3):
    got = got.astype(jnp.float32)
    want = want.astype(jnp.float32)
    ok = bool(jnp.allclose(got, want, atol=atol, rtol=rtol))
    assert ok, f"{name} mismatch: max|diff|={float(jnp.max(jnp.abs(got - want)))}"


if __name__ == "__main__":
    key = jax.random.PRNGKey(0)
    k_s1, k_s2, k_we, k_w1, k_b1, k_w2, k_b2, k_s1b, k_s2b = jax.random.split(key, 9)

    B, L, D = 4, 8, 32
    s1 = jax.random.normal(k_s1, (B, L, D), dtype=jnp.float32)
    s2 = jax.random.normal(k_s2, (B, L, D), dtype=jnp.float32)

    # nn.Linear layout: weights are (out_features, in_features).
    we = 0.1 * jax.random.normal(k_we, (D, D), dtype=jnp.float32)
    w1 = 0.1 * jax.random.normal(k_w1, (D, D), dtype=jnp.float32)
    b1 = 0.1 * jax.random.normal(k_b1, (D,), dtype=jnp.float32)
    w2 = 0.1 * jax.random.normal(k_w2, (D, D), dtype=jnp.float32)
    b2 = 0.1 * jax.random.normal(k_b2, (D,), dtype=jnp.float32)
    params = (we, w1, b1, w2, b2)

    # Masks: mostly ones, with the tail of some sequences masked out.
    mask1 = jnp.ones((B, L), jnp.float32).at[1, -2:].set(0.0).at[3, -3:].set(0.0)
    mask2 = jnp.ones((B, L), jnp.float32).at[0, -1:].set(0.0).at[2, -4:].set(0.0)

    # Case 1: masked, multi-batch blocks (Bt > 1, fori_loop path, bf16 outputs).
    o1, o2, n1, n2 = distill_forward(s1, s2, params, mask1, mask2)
    jax.block_until_ready((o1, o2, n1, n2))
    r1, r2, rn1, rn2 = distill_reference(s1, s2, params, mask1, mask2)
    _check("o1", o1, r1, atol=2e-2, rtol=2e-2)   # bf16 output quantization
    _check("o2", o2, r2, atol=2e-2, rtol=2e-2)
    _check("n1", n1, rn1)
    _check("n2", n2, rn2)

    # Case 2: no masks, B=2 (Bt == 1 path, default-mask branch, f32 outputs).
    s1s = jax.random.normal(k_s1b, (2, L, D), dtype=jnp.float32)
    s2s = jax.random.normal(k_s2b, (2, L, D), dtype=jnp.float32)
    o1s, o2s, n1s, n2s = distill_forward(s1s, s2s, params, out_dtype=jnp.float32)
    jax.block_until_ready((o1s, o2s, n1s, n2s))
    r1s, r2s, rn1s, rn2s = distill_reference(s1s, s2s, params)
    _check("o1 (no mask)", o1s, r1s)
    _check("o2 (no mask)", o2s, r2s)
    _check("n1 (no mask)", n1s, rn1s)
    _check("n2 (no mask)", n2s, rn2s)

    print("KERNEL_OK")
</pallas_src>

<mosaic_0001>
module attributes {stable_mosaic.version = 11 : i64} {
  func.func @_distill_kernel(%arg0: i32, %arg1: memref<16x32xbf16, #tpu.memory_space<vmem>>, %arg2: memref<16x32xbf16, #tpu.memory_space<vmem>>, %arg3: memref<2x8x1xf32, #tpu.memory_space<vmem>>, %arg4: memref<2x1x8xf32, #tpu.memory_space<vmem>>, %arg5: memref<32x32xbf16, #tpu.memory_space<vmem>>, %arg6: memref<32x32xbf16, #tpu.memory_space<vmem>>, %arg7: memref<1x32xf32, #tpu.memory_space<vmem>>, %arg8: memref<32x32xbf16, #tpu.memory_space<vmem>>, %arg9: memref<1x32xf32, #tpu.memory_space<vmem>>, %arg10: memref<16x32xbf16, #tpu.memory_space<vmem>>, %arg11: memref<16x32xbf16, #tpu.memory_space<vmem>>, %arg12: memref<1x1x128xf32, #tpu.memory_space<vmem>>, %arg13: memref<16x32xf32, #tpu.memory_space<vmem>>, %arg14: memref<16x32xf32, #tpu.memory_space<vmem>>, %arg15: memref<16x32xf32, #tpu.memory_space<vmem>>) attributes {dimension_semantics = [#tpu.dimension_semantics<parallel>], iteration_bounds = array<i64: 2>, scalar_prefetch = 0 : i64, scratch_operands = 3 : i64, tpu.core_type = #tpu.core_type<tc>, window_params = [{transform_indices = @transform_0, window_bounds = array<i64: 16, 32>}, {transform_indices = @transform_1, window_bounds = array<i64: 16, 32>}, {transform_indices = @transform_2, window_bounds = array<i64: 2, 8, 1>}, {transform_indices = @transform_3, window_bounds = array<i64: 2, 1, 8>}, {pipeline_mode = #tpu.pipeline_mode<synchronous>, transform_indices = @transform_4, window_bounds = array<i64: 32, 32>}, {pipeline_mode = #tpu.pipeline_mode<synchronous>, transform_indices = @transform_5, window_bounds = array<i64: 32, 32>}, {pipeline_mode = #tpu.pipeline_mode<synchronous>, transform_indices = @transform_6, window_bounds = array<i64: 1, 32>}, {pipeline_mode = #tpu.pipeline_mode<synchronous>, transform_indices = @transform_7, window_bounds = array<i64: 32, 32>}, {pipeline_mode = #tpu.pipeline_mode<synchronous>, transform_indices = @transform_8, window_bounds = array<i64: 1, 32>}, {transform_indices = @transform_9, window_bounds = array<i64: 16, 32>}, {transform_indices = @transform_10, window_bounds = array<i64: 16, 32>}, {transform_indices = @transform_11, window_bounds = array<i64: 1, 1, 128>}]} {
    %c0 = arith.constant 0 : index
    %c0_0 = arith.constant 0 : index
    %0 = vector.load %arg1[%c0, %c0_0] : memref<16x32xbf16, #tpu.memory_space<vmem>>, vector<16x32xbf16>
    %c0_1 = arith.constant 0 : index
    %c0_2 = arith.constant 0 : index
    %1 = vector.load %arg5[%c0_1, %c0_2] : memref<32x32xbf16, #tpu.memory_space<vmem>>, vector<32x32xbf16>
    %cst = arith.constant dense<0.000000e+00> : vector<16x32xf32>
    %2 = tpu.matmul %0, %1, %cst {dimension_numbers = #tpu.dot_dimension_numbers<[1], [0], [0], [1], [0, 0, 1, 1], [], []>} : vector<16x32xbf16>, vector<32x32xbf16>, vector<16x32xf32> -> vector<16x32xf32>
    %c0_3 = arith.constant 0 : index
    %c0_4 = arith.constant 0 : index
    %3 = vector.load %arg13[%c0_3, %c0_4] : memref<16x32xf32, #tpu.memory_space<vmem>>, vector<16x32xf32>
    tpu.vector_store %arg13[%c0_3, %c0_4], %2 {strides = array<i32>} : memref<16x32xf32, #tpu.memory_space<vmem>>, vector<16x32xf32>,
    %c0_i32 = arith.constant 0 : i32
    %c2_i32 = arith.constant 2 : i32
    %4 = arith.addi %c0_i32, %c2_i32 : i32
    %c1_i32 = arith.constant 1 : i32
    scf.for %arg16 = %c0_i32 to %4 step %c1_i32  : i32 {
      %c8_i32 = arith.constant 8 : i32
      %63 = arith.muli %arg16, %c8_i32 : i32
      %64 = tpu.assume_multiple %63, 8 : i32
      %65 = arith.index_cast %64 : i32 to index
      %c0_40 = arith.constant 0 : index
      %66 = vector.load %arg13[%65, %c0_40] : memref<16x32xf32, #tpu.memory_space<vmem>>, vector<8x32xf32>
      %67 = arith.truncf %66 : vector<8x32xf32> to vector<8x32xbf16>
      %68 = arith.index_cast %64 : i32 to index
      %c0_41 = arith.constant 0 : index
      %69 = vector.load %arg2[%68, %c0_41] : memref<16x32xbf16, #tpu.memory_space<vmem>>, vector<8x32xbf16>
      %cst_42 = arith.constant dense<0.000000e+00> : vector<8x8xf32>
      %70 = tpu.matmul %67, %69, %cst_42 {dimension_numbers = #tpu.dot_dimension_numbers<[1], [1], [0], [0], [0, 0, 1, 0], [], []>} : vector<8x32xbf16>, vector<8x32xbf16>, vector<8x8xf32> -> vector<8x8xf32>
      %71 = arith.index_cast %arg16 : i32 to index
      %c0_43 = arith.constant 0 : index
      %c0_44 = arith.constant 0 : index
      %72 = vector.load %arg3[%71, %c0_43, %c0_44] : memref<2x8x1xf32, #tpu.memory_space<vmem>>, vector<1x8x1xf32>
      %73 = vector.shape_cast %72 : vector<1x8x1xf32> to vector<8x1xf32>
      %74 = arith.index_cast %arg16 : i32 to index
      %c0_45 = arith.constant 0 : index
      %c0_46 = arith.constant 0 : index
      %75 = vector.load %arg4[%74, %c0_45, %c0_46] : memref<2x1x8xf32, #tpu.memory_space<vmem>>, vector<1x1x8xf32>
      %76 = vector.shape_cast %75 : vector<1x1x8xf32> to vector<1x8xf32>
      %77 = vector.broadcast %73 : vector<8x1xf32> to vector<8x8xf32>
      %78 = vector.broadcast %76 : vector<1x8xf32> to vector<8x8xf32>
      %79 = arith.mulf %77, %78 : vector<8x8xf32>
      %cst_47 = arith.constant 1.000000e+05 : f32
      %80 = vector.broadcast %cst_47 : f32 to vector<8x8xf32>
      %81 = arith.subf %79, %80 : vector<8x8xf32>
      %82 = arith.addf %70, %81 : vector<8x8xf32>
      %cst_48 = arith.constant dense<0xFF800000> : vector<8xf32>
      %83 = vector.multi_reduction <maximumf>, %82, %cst_48 [1] : vector<8x8xf32> to vector<8xf32>
      %84 = vector.shape_cast %83 : vector<8xf32> to vector<8x1xf32>
      %85 = vector.broadcast %84 : vector<8x1xf32> to vector<8x8xf32>
      %86 = arith.subf %82, %85 : vector<8x8xf32>
      %87 = math.exp %86 : vector<8x8xf32>
      %cst_49 = arith.constant dense<0.000000e+00> : vector<8xf32>
      %88 = vector.multi_reduction <add>, %87, %cst_49 [1] : vector<8x8xf32> to vector<8xf32>
      %89 = vector.shape_cast %88 : vector<8xf32> to vector<8x1xf32>
      %90 = tpu.reciprocal %89 {approx = true} : vector<8x1xf32> -> vector<8x1xf32>
      %91 = vector.broadcast %90 : vector<8x1xf32> to vector<8x8xf32>
      %92 = arith.mulf %87, %91 : vector<8x8xf32>
      %cst_50 = arith.constant dense<0xFF800000> : vector<8xf32>
      %93 = vector.multi_reduction <maximumf>, %82, %cst_50 [0] : vector<8x8xf32> to vector<8xf32>
      %94 = vector.shape_cast %93 : vector<8xf32> to vector<1x8xf32>
      %95 = vector.broadcast %94 : vector<1x8xf32> to vector<8x8xf32>
      %96 = arith.subf %82, %95 : vector<8x8xf32>
      %97 = math.exp %96 : vector<8x8xf32>
      %cst_51 = arith.constant dense<0.000000e+00> : vector<8xf32>
      %98 = vector.multi_reduction <add>, %97, %cst_51 [0] : vector<8x8xf32> to vector<8xf32>
      %99 = vector.shape_cast %98 : vector<8xf32> to vector<1x8xf32>
      %100 = tpu.reciprocal %99 {approx = true} : vector<1x8xf32> -> vector<1x8xf32>
      %101 = vector.broadcast %100 : vector<1x8xf32> to vector<8x8xf32>
      %102 = arith.mulf %97, %101 : vector<8x8xf32>
      %103 = arith.truncf %92 : vector<8x8xf32> to vector<8x8xbf16>
      %cst_52 = arith.constant dense<0.000000e+00> : vector<8x32xf32>
      %104 = tpu.matmul %103, %69, %cst_52 {dimension_numbers = #tpu.dot_dimension_numbers<[1], [0], [0], [1], [0, 0, 1, 1], [], []>} : vector<8x8xbf16>, vector<8x32xbf16>, vector<8x32xf32> -> vector<8x32xf32>
      %105 = arith.truncf %102 : vector<8x8xf32> to vector<8x8xbf16>
      %cst_53 = arith.constant dense<0.000000e+00> : vector<8x32xf32>
      %106 = tpu.matmul %105, %67, %cst_53 {dimension_numbers = #tpu.dot_dimension_numbers<[0], [0], [1], [1], [0, 1, 1, 1], [], []>} : vector<8x8xbf16>, vector<8x32xbf16>, vector<8x32xf32> -> vector<8x32xf32>
      %107 = arith.subf %66, %104 : vector<8x32xf32>
      %108 = arith.index_cast %64 : i32 to index
      %c0_54 = arith.constant 0 : index
      %109 = vector.load %arg14[%108, %c0_54] : memref<16x32xf32, #tpu.memory_space<vmem>>, vector<8x32xf32>
      tpu.vector_store %arg14[%108, %c0_54], %107 {strides = array<i32>} : memref<16x32xf32, #tpu.memory_space<vmem>>, vector<8x32xf32>,
      %110 = arith.extf %69 : vector<8x32xbf16> to vector<8x32xf32>
      %111 = arith.subf %110, %106 : vector<8x32xf32>
      %112 = arith.index_cast %64 : i32 to index
      %c0_55 = arith.constant 0 : index
      %113 = vector.load %arg15[%112, %c0_55] : memref<16x32xf32, #tpu.memory_space<vmem>>, vector<8x32xf32>
      tpu.vector_store %arg15[%112, %c0_55], %111 {strides = array<i32>} : memref<16x32xf32, #tpu.memory_space<vmem>>, vector<8x32xf32>,
    }
    %c2_i32_5 = arith.constant 2 : i32
    %c0_6 = arith.constant 0 : index
    %c0_7 = arith.constant 0 : index
    %5 = vector.load %arg14[%c0_6, %c0_7] : memref<16x32xf32, #tpu.memory_space<vmem>>, vector<16x32xf32>
    %6 = arith.truncf %5 : vector<16x32xf32> to vector<16x32xbf16>
    %c0_8 = arith.constant 0 : index
    %c0_9 = arith.constant 0 : index
    %7 = vector.load %arg6[%c0_8, %c0_9] : memref<32x32xbf16, #tpu.memory_space<vmem>>, vector<32x32xbf16>
    %cst_10 = arith.constant dense<0.000000e+00> : vector<16x32xf32>
    %8 = tpu.matmul %6, %7, %cst_10 {dimension_numbers = #tpu.dot_dimension_numbers<[1], [0], [0], [1], [0, 0, 1, 1], [], []>} : vector<16x32xbf16>, vector<32x32xbf16>, vector<16x32xf32> -> vector<16x32xf32>
    %c0_11 = arith.constant 0 : index
    %c0_12 = arith.constant 0 : index
    %9 = vector.load %arg7[%c0_11, %c0_12] : memref<1x32xf32, #tpu.memory_space<vmem>>, vector<1x32xf32>
    %10 = vector.broadcast %9 : vector<1x32xf32> to vector<16x32xf32>
    %11 = arith.addf %8, %10 : vector<16x32xf32>
    %c0_13 = arith.constant 0 : index
    %c0_14 = arith.constant 0 : index
    %12 = vector.load %arg15[%c0_13, %c0_14] : memref<16x32xf32, #tpu.memory_space<vmem>>, vector<16x32xf32>
    %13 = arith.truncf %12 : vector<16x32xf32> to vector<16x32xbf16>
    %c0_15 = arith.constant 0 : index
    %c0_16 = arith.constant 0 : index
    %14 = vector.load %arg8[%c0_15, %c0_16] : memref<32x32xbf16, #tpu.memory_space<vmem>>, vector<32x32xbf16>
    %cst_17 = arith.constant dense<0.000000e+00> : vector<16x32xf32>
    %15 = tpu.matmul %13, %14, %cst_17 {dimension_numbers = #tpu.dot_dimension_numbers<[1], [0], [0], [1], [0, 0, 1, 1], [], []>} : vector<16x32xbf16>, vector<32x32xbf16>, vector<16x32xf32> -> vector<16x32xf32>
    %c0_18 = arith.constant 0 : index
    %c0_19 = arith.constant 0 : index
    %16 = vector.load %arg9[%c0_18, %c0_19] : memref<1x32xf32, #tpu.memory_space<vmem>>, vector<1x32xf32>
    %17 = vector.broadcast %16 : vector<1x32xf32> to vector<16x32xf32>
    %18 = arith.addf %15, %17 : vector<16x32xf32>
    %19 = arith.negf %11 : vector<16x32xf32>
    %20 = math.exp %19 : vector<16x32xf32>
    %cst_20 = arith.constant 1.000000e+00 : f32
    %21 = vector.broadcast %cst_20 : f32 to vector<16x32xf32>
    %22 = arith.addf %21, %20 : vector<16x32xf32>
    %23 = arith.divf %21, %22 : vector<16x32xf32>
    %24 = arith.negf %18 : vector<16x32xf32>
    %25 = math.exp %24 : vector<16x32xf32>
    %cst_21 = arith.constant 1.000000e+00 : f32
    %26 = vector.broadcast %cst_21 : f32 to vector<16x32xf32>
    %27 = arith.addf %26, %25 : vector<16x32xf32>
    %28 = arith.divf %26, %27 : vector<16x32xf32>
    %c0_22 = arith.constant 0 : index
    %c0_23 = arith.constant 0 : index
    %29 = vector.load %arg13[%c0_22, %c0_23] : memref<16x32xf32, #tpu.memory_space<vmem>>, vector<16x32xf32>
    %cst_24 = arith.constant 1.000000e+00 : f32
    %30 = vector.broadcast %cst_24 : f32 to vector<16x32xf32>
    %31 = arith.subf %30, %23 : vector<16x32xf32>
    %32 = arith.mulf %29, %31 : vector<16x32xf32>
    %33 = arith.truncf %32 : vector<16x32xf32> to vector<16x32xbf16>
    %c0_25 = arith.constant 0 : index
    %c0_26 = arith.constant 0 : index
    %34 = vector.load %arg10[%c0_25, %c0_26] : memref<16x32xbf16, #tpu.memory_space<vmem>>, vector<16x32xbf16>
    tpu.vector_store %arg10[%c0_25, %c0_26], %33 {strides = array<i32>} : memref<16x32xbf16, #tpu.memory_space<vmem>>, vector<16x32xbf16>,
    %c0_27 = arith.constant 0 : index
    %c0_28 = arith.constant 0 : index
    %35 = vector.load %arg2[%c0_27, %c0_28] : memref<16x32xbf16, #tpu.memory_space<vmem>>, vector<16x32xbf16>
    %36 = arith.extf %35 : vector<16x32xbf16> to vector<16x32xf32>
    %cst_29 = arith.constant 1.000000e+00 : f32
    %37 = vector.broadcast %cst_29 : f32 to vector<16x32xf32>
    %38 = arith.subf %37, %28 : vector<16x32xf32>
    %39 = arith.mulf %36, %38 : vector<16x32xf32>
    %40 = arith.truncf %39 : vector<16x32xf32> to vector<16x32xbf16>
    %c0_30 = arith.constant 0 : index
    %c0_31 = arith.constant 0 : index
    %41 = vector.load %arg11[%c0_30, %c0_31] : memref<16x32xbf16, #tpu.memory_space<vmem>>, vector<16x32xbf16>
    tpu.vector_store %arg11[%c0_30, %c0_31], %40 {strides = array<i32>} : memref<16x32xbf16, #tpu.memory_space<vmem>>, vector<16x32xbf16>,
    %42 = tpu.iota {dimensions = array<i32: 2>} : vector<1x1x128xi32>
    %43 = math.absf %23 : vector<16x32xf32>
    %44 = vector.shape_cast %43 : vector<16x32xf32> to vector<1x16x32xf32>
    %cst_32 = arith.constant dense<0.000000e+00> : vector<1xf32>
    %45 = vector.multi_reduction <add>, %44, %cst_32 [1, 2] : vector<1x16x32xf32> to vector<1xf32>
    %46 = vector.shape_cast %45 : vector<1xf32> to vector<1x1x1xf32>
    %47 = vector.extract %46[0, 0, 0] : f32 from vector<1x1x1xf32>
    %48 = math.absf %28 : vector<16x32xf32>
    %49 = vector.shape_cast %48 : vector<16x32xf32> to vector<1x16x32xf32>
    %cst_33 = arith.constant dense<0.000000e+00> : vector<1xf32>
    %50 = vector.multi_reduction <add>, %49, %cst_33 [1, 2] : vector<1x16x32xf32> to vector<1xf32>
    %51 = vector.shape_cast %50 : vector<1xf32> to vector<1x1x1xf32>
    %52 = vector.extract %51[0, 0, 0] : f32 from vector<1x1x1xf32>
    %c0_i32_34 = arith.constant 0 : i32
    %53 = vector.broadcast %c0_i32_34 : i32 to vector<1x1x128xi32>
    %54 = arith.cmpi eq, %42, %53 : vector<1x1x128xi32>
    %c1_i32_35 = arith.constant 1 : i32
    %55 = vector.broadcast %c1_i32_35 : i32 to vector<1x1x128xi32>
    %56 = arith.cmpi eq, %42, %55 : vector<1x1x128xi32>
    %cst_36 = arith.constant 0.000000e+00 : f32
    %57 = vector.broadcast %52 : f32 to vector<1x1x128xf32>
    %58 = vector.broadcast %cst_36 : f32 to vector<1x1x128xf32>
    %59 = arith.select %56, %57, %58 : vector<1x1x128xi1>, vector<1x1x128xf32>
    %60 = vector.broadcast %47 : f32 to vector<1x1x128xf32>
    %61 = arith.select %54, %60, %59 : vector<1x1x128xi1>, vector<1x1x128xf32>
    %c0_37 = arith.constant 0 : index
    %c0_38 = arith.constant 0 : index
    %c0_39 = arith.constant 0 : index
    %62 = vector.load %arg12[%c0_37, %c0_38, %c0_39] : memref<1x1x128xf32, #tpu.memory_space<vmem>>, vector<1x1x128xf32>
    tpu.vector_store %arg12[%c0_37, %c0_38, %c0_39], %61 {strides = array<i32>} : memref<1x1x128xf32, #tpu.memory_space<vmem>>, vector<1x1x128xf32>,
    return
  }
  func.func @transform_0(%arg0: i32) -> (i32, i32) {
    %c0_i32 = arith.constant 0 : i32
    %c0_i32_0 = arith.constant 0 : i32
    return %arg0, %c0_i32 : i32, i32
  }
  func.func @transform_1(%arg0: i32) -> (i32, i32) {
    %c0_i32 = arith.constant 0 : i32
    %c0_i32_0 = arith.constant 0 : i32
    return %arg0, %c0_i32 : i32, i32
  }
  func.func @transform_2(%arg0: i32) -> (i32, i32, i32) {
    %c0_i32 = arith.constant 0 : i32
    %c0_i32_0 = arith.constant 0 : i32
    %c0_i32_1 = arith.constant 0 : i32
    return %arg0, %c0_i32, %c0_i32_0 : i32, i32, i32
  }
  func.func @transform_3(%arg0: i32) -> (i32, i32, i32) {
    %c0_i32 = arith.constant 0 : i32
    %c0_i32_0 = arith.constant 0 : i32
    %c0_i32_1 = arith.constant 0 : i32
    return %arg0, %c0_i32, %c0_i32_0 : i32, i32, i32
  }
  func.func @transform_4(%arg0: i32) -> (i32, i32) {
    %c0_i32 = arith.constant 0 : i32
    %c0_i32_0 = arith.constant 0 : i32
    %c0_i32_1 = arith.constant 0 : i32
    return %c0_i32, %c0_i32_0 : i32, i32
  }
  func.func @transform_5(%arg0: i32) -> (i32, i32) {
    %c0_i32 = arith.constant 0 : i32
    %c0_i32_0 = arith.constant 0 : i32
    %c0_i32_1 = arith.constant 0 : i32
    return %c0_i32, %c0_i32_0 : i32, i32
  }
  func.func @transform_6(%arg0: i32) -> (i32, i32) {
    %c0_i32 = arith.constant 0 : i32
    %c0_i32_0 = arith.constant 0 : i32
    %c0_i32_1 = arith.constant 0 : i32
    return %c0_i32, %c0_i32_0 : i32, i32
  }
  func.func @transform_7(%arg0: i32) -> (i32, i32) {
    %c0_i32 = arith.constant 0 : i32
    %c0_i32_0 = arith.constant 0 : i32
    %c0_i32_1 = arith.constant 0 : i32
    return %c0_i32, %c0_i32_0 : i32, i32
  }
  func.func @transform_8(%arg0: i32) -> (i32, i32) {
    %c0_i32 = arith.constant 0 : i32
    %c0_i32_0 = arith.constant 0 : i32
    %c0_i32_1 = arith.constant 0 : i32
    return %c0_i32, %c0_i32_0 : i32, i32
  }
  func.func @transform_9(%arg0: i32) -> (i32, i32) {
    %c0_i32 = arith.constant 0 : i32
    %c0_i32_0 = arith.constant 0 : i32
    return %arg0, %c0_i32 : i32, i32
  }
  func.func @transform_10(%arg0: i32) -> (i32, i32) {
    %c0_i32 = arith.constant 0 : i32
    %c0_i32_0 = arith.constant 0 : i32
    return %arg0, %c0_i32 : i32, i32
  }
  func.func @transform_11(%arg0: i32) -> (i32, i32, i32) {
    %c0_i32 = arith.constant 0 : i32
    %c0_i32_0 = arith.constant 0 : i32
    %c0_i32_1 = arith.constant 0 : i32
    return %arg0, %c0_i32, %c0_i32_0 : i32, i32, i32
  }
}

</mosaic_0001>

<llo_original>
// kernel: tpu_custom_call.1
$region0: #{tpu_custom_call.1}
  #allocation0 [shape = 'u32[]', space=smem, size = 0x4, offset = 0x4, fixed_abs, tag = 'smem constant byte address 0x4 - core index']
  #allocation1 [shape = 'u32[144,128]{1,0:T(1,128)}', space=vmem, size = 0x12000, scoped, tag = 'internal scratch']
  #allocation2 [shape = 'f32[16,32]{1,0:T(8,128)}', space=vmem, size = 0x2000, scoped, tag = 'scratch operand']
  #allocation3 [shape = 'f32[16,32]{1,0:T(8,128)}', space=vmem, size = 0x2000, scoped, tag = 'scratch operand']
  #allocation4 [shape = 'f32[16,32]{1,0:T(8,128)}', space=vmem, size = 0x2000, scoped, tag = 'scratch operand']
  %s0 = inlined_call_operand.vmem [shape: bf16[32,32], index: 0, kind: input, shape index: {}]
  %s1 = inlined_call_operand.vmem [shape: bf16[32,32], index: 1, kind: input, shape index: {}]
  %s2 = inlined_call_operand.vmem [shape: f32[4,8,1], index: 2, kind: input, shape index: {}]
  %s3 = inlined_call_operand.hbm [shape: f32[4,1,8], index: 3, kind: input, shape index: {}]
  %s4 = inlined_call_operand.hbm [shape: bf16[32,32], index: 4, kind: input, shape index: {}]
  %s5 = inlined_call_operand.hbm [shape: bf16[32,32], index: 5, kind: input, shape index: {}]
  %s6 = inlined_call_operand.hbm [shape: f32[1,32], index: 6, kind: input, shape index: {}]
  %s7 = inlined_call_operand.vmem [shape: bf16[32,32], index: 7, kind: input, shape index: {}]
  %s8 = inlined_call_operand.vmem [shape: f32[1,32], index: 8, kind: input, shape index: {}]
  %s9 = inlined_call_operand.hbm [shape: bf16[32,32], index: 9, kind: output, shape index: {0}]
  %s10 = inlined_call_operand.hbm [shape: bf16[32,32], index: 10, kind: output, shape index: {1}]
  %s11 = inlined_call_operand.hbm [shape: f32[2,1,128], index: 11, kind: output, shape index: {2}]
  %12 = xla_tuple %s9, %s10, %s11
  %s13 = sld [smem:[#allocation0]]
  $region108: #{tpu_custom_call.1} parent=0
    _
  %s15 = ssub.s32 1, %s13
  %s16 = scalar_select 0, %s15, %s13
  $region1: #{tpu_custom_call.1} parent=0
    #allocation5 [shape = 'u8[2048]{0}', space=vmem, size = 0x800, scoped, tag = 'input window, operand 3']
    #allocation6 [shape = 's32[2]{0}', space=sflag, size = 0x8, scoped, tag = 'scoped memory for tpu_custom_call.1']
    #allocation7 [shape = 's32[2]{0}', space=sflag, size = 0x8, scoped, tag = 'scoped memory for tpu_custom_call.1']
    #allocation8 [shape = 'u8[8192]{0}', space=vmem, size = 0x2000, scoped, tag = 'input window, operand 4, single buffered']
    #allocation9 [shape = 's32[1]{0}', space=sflag, size = 0x4, scoped, tag = 'scoped memory for tpu_custom_call.1']
    #allocation10 [shape = 'u8[8192]{0}', space=vmem, size = 0x2000, scoped, tag = 'input window, operand 5, single buffered']
    #allocation11 [shape = 'u8[512]{0}', space=vmem, size = 0x400, scoped, tag = 'input window, operand 6, single buffered']
    #allocation12 [shape = 's32[1]{0}', space=sflag, size = 0x4, scoped, tag = 'scoped memory for tpu_custom_call.1']
    #allocation13 [shape = 'u8[8192]{0}', space=vmem, size = 0x2000, scoped, tag = 'output window, operand 0']
    #allocation14 [shape = 'u8[8192]{0}', space=vmem, size = 0x2000, scoped, tag = 'output window, operand 1']
    #allocation15 [shape = 's32[2]{0}', space=sflag, size = 0x8, scoped, tag = 'scoped memory for tpu_custom_call.1']
    #allocation16 [shape = 'u8[1024]{0}', space=vmem, size = 0x400, scoped, tag = 'output window, operand 2']
    %17 = vsyncpa [#allocation6], 0
    %s18 = scalar_lea.sflag [#allocation6], 1
    %19 = vsyncpa %s18, 0
    %20 = vsyncpa [#allocation9], 0
    %21 = vsyncpa [#allocation12], 0
    %22 = vsyncpa [#allocation7], 0
    %s23 = scalar_lea.sflag [#allocation7], 1
    %24 = vsyncpa %s23, 0
    %25 = vsyncpa [#allocation15], 0
    %s26 = scalar_lea.sflag [#allocation15], 1
    %27 = vsyncpa %s26, 0
    loop: start=0, step=1, limit=4
    $region2: #{tpu_custom_call.1} parent=1 // loop_pre_header
      _
    $region3: #{tpu_custom_call.1} parent=1 // loop_header
      %s29 = sphi 0, %s33
      %p30 = scmp.ge.s32.totalorder %s29, 4
      %s39 = sphi 0, %s41
      %s42 = sphi 0, %s39
      %s43 = sphi 0, %s42
      %s59 = sphi 0, %s43
      %s65 = sphi 0, %s67
      %s68 = sphi 0, %s65
      %s69 = sphi 0, %s68
      %s85 = sphi 0, %s69
      %s91 = sphi 0, %s93
      %s94 = sphi 0, %s91
      %s95 = sphi 0, %s94
      %s111 = sphi 0, %s95
      %s117 = sphi 0, %s119
      %s120 = sphi 0, %s117
      %s121 = sphi 0, %s120
      %s137 = sphi 0, %s121
      %s141 = sphi 0, %s141
      %s143 = sphi 0, %s141
      %s144 = sphi 0, %s143
      %s158 = sphi 0, %s144
      %s162 = sphi 0, %s162
      %s164 = sphi 0, %s162
      %s165 = sphi 0, %s164
      %s179 = sphi 0, %s165
      %s183 = sphi 0, %s183
      %s185 = sphi 0, %s183
      %s186 = sphi 0, %s185
      %s200 = sphi 0, %s186
      %s204 = sphi 0, %s204
      %s206 = sphi 0, %s204
      %s207 = sphi 0, %s206
      %s221 = sphi 0, %s207
      %s225 = sphi 0, %s225
      %s227 = sphi 0, %s225
      %s228 = sphi 0, %s227
      %s242 = sphi 0, %s228
      %s248 = sphi 0, %s250
      %s251 = sphi 0, %s248
      %s252 = sphi 0, %s251
      %s268 = sphi 0, %s252
      %s274 = sphi 0, %s276
      %s277 = sphi 0, %s274
      %s278 = sphi 0, %s277
      %s294 = sphi 0, %s278
      %s300 = sphi 0, %s302
      %s303 = sphi 0, %s300
      %s304 = sphi 0, %s303
      %s320 = sphi 0, %s304
    $region4: #{tpu_custom_call.1} parent=1 // loop_header_branch
      %32 = sbr.rel (%p30) target = $region8
    $region5: #{tpu_custom_call.1} parent=1 // loop_body
      %s34 = ssub.s32 %s29, 1
      %s35 = ssub.s32 %s29, 2
      %s36 = sadd.s32 %s29, 1
      %s37 = ssub.s32 %s29, %s36
      %p38 = scmp.eq.s32.totalorder %s37, 0
      %s40 = sadd.s32 %s39, 1
      %s41 = scalar_select %p38, %s39, %s40
      %p44 = pneg %p38
      %p45 = scmp.eq.s32.totalorder %s29, 1
      %p46 = por %p44, %p45
      %p47 = scmp.ne.s32.totalorder %s39, %s42
      %p48 = scmp.eq.s32.totalorder %s29, 0
      %p49 = por %p47, %p48
      %p50 = scmp.ne.s32.totalorder %s39, %s42
      %p51 = scmp.eq.s32.totalorder %s34, 1
      %p52 = por %p50, %p51
      %p53 = scmp.ne.s32.totalorder %s42, %s43
      %p54 = scmp.eq.s32.totalorder %s34, 0
      %p55 = por %p53, %p54
      %p56 = scmp.ne.s32.totalorder %s42, %s43
      %p57 = scmp.eq.s32.totalorder %s35, 1
      %p58 = por %p56, %p57
      %p60 = scmp.ne.s32.totalorder %s43, %s59
      %p61 = scmp.eq.s32.totalorder %s35, 0
      %p62 = por %p60, %p61
      %s63 = ssub.s32 %s29, %s36
      %p64 = scmp.eq.s32.totalorder %s63, 0
      %s66 = sadd.s32 %s65, 1
      %s67 = scalar_select %p64, %s65, %s66
      %p70 = pneg %p64
      %p71 = scmp.eq.s32.totalorder %s29, 1
      %p72 = por %p70, %p71
      %p73 = scmp.ne.s32.totalorder %s65, %s68
      %p74 = scmp.eq.s32.totalorder %s29, 0
      %p75 = por %p73, %p74
      %p76 = scmp.ne.s32.totalorder %s65, %s68
      %p77 = scmp.eq.s32.totalorder %s34, 1
      %p78 = por %p76, %p77
      %p79 = scmp.ne.s32.totalorder %s68, %s69
      %p80 = scmp.eq.s32.totalorder %s34, 0
      %p81 = por %p79, %p80
      %p82 = scmp.ne.s32.totalorder %s68, %s69
      %p83 = scmp.eq.s32.totalorder %s35, 1
      %p84 = por %p82, %p83
      %p86 = scmp.ne.s32.totalorder %s69, %s85
      %p87 = scmp.eq.s32.totalorder %s35, 0
      %p88 = por %p86, %p87
      %s89 = ssub.s32 %s29, %s36
      %p90 = scmp.eq.s32.totalorder %s89, 0
      %s92 = sadd.s32 %s91, 1
      %s93 = scalar_select %p90, %s91, %s92
      %p96 = pneg %p90
      %p97 = scmp.eq.s32.totalorder %s29, 1
      %p98 = por %p96, %p97
      %p99 = scmp.ne.s32.totalorder %s91, %s94
      %p100 = scmp.eq.s32.totalorder %s29, 0
      %p101 = por %p99, %p100
      %p102 = scmp.ne.s32.totalorder %s91, %s94
      %p103 = scmp.eq.s32.totalorder %s34, 1
      %p104 = por %p102, %p103
      %p105 = scmp.ne.s32.totalorder %s94, %s95
      %p106 = scmp.eq.s32.totalorder %s34, 0
      %p107 = por %p105, %p106
      %p108 = scmp.ne.s32.totalorder %s94, %s95
      %p109 = scmp.eq.s32.totalorder %s35, 1
      %p110 = por %p108, %p109
      %p112 = scmp.ne.s32.totalorder %s95, %s111
      %p113 = scmp.eq.s32.totalorder %s35, 0
      %p114 = por %p112, %p113
      %s115 = ssub.s32 %s29, %s36
      %p116 = scmp.eq.s32.totalorder %s115, 0
      %s118 = sadd.s32 %s117, 1
      %s119 = scalar_select %p116, %s117, %s118
      %p122 = pneg %p116
      %p123 = scmp.eq.s32.totalorder %s29, 1
      %p124 = por %p122, %p123
      %p125 = scmp.ne.s32.totalorder %s117, %s120
      %p126 = scmp.eq.s32.totalorder %s29, 0
      %p127 = por %p125, %p126
      %p128 = scmp.ne.s32.totalorder %s117, %s120
      %p129 = scmp.eq.s32.totalorder %s34, 1
      %p130 = por %p128, %p129
      %p131 = scmp.ne.s32.totalorder %s120, %s121
      %p132 = scmp.eq.s32.totalorder %s34, 0
      %p133 = por %p131, %p132
      %p134 = scmp.ne.s32.totalorder %s120, %s121
      %p135 = scmp.eq.s32.totalorder %s35, 1
      %p136 = por %p134, %p135
      %p138 = scmp.ne.s32.totalorder %s121, %s137
      %p139 = scmp.eq.s32.totalorder %s35, 0
      %p140 = por %p138, %p139
      %s142 = sadd.s32 %s141, 1
      %p145 = scmp.eq.s32.totalorder %s29, 1
      %p146 = scmp.ne.s32.totalorder %s141, %s143
      %p147 = scmp.eq.s32.totalorder %s29, 0
      %p148 = por %p146, %p147
      %p149 = scmp.ne.s32.totalorder %s141, %s143
      %p150 = scmp.eq.s32.totalorder %s34, 1
      %p151 = por %p149, %p150
      %p152 = scmp.ne.s32.totalorder %s143, %s144
      %p153 = scmp.eq.s32.totalorder %s34, 0
      %p154 = por %p152, %p153
      %p155 = scmp.ne.s32.totalorder %s143, %s144
      %p156 = scmp.eq.s32.totalorder %s35, 1
      %p157 = por %p155, %p156
      %p159 = scmp.ne.s32.totalorder %s144, %s158
      %p160 = scmp.eq.s32.totalorder %s35, 0
      %p161 = por %p159, %p160
      %s163 = sadd.s32 %s162, 1
      %p166 = scmp.eq.s32.totalorder %s29, 1
      %p167 = scmp.ne.s32.totalorder %s162, %s164
      %p168 = scmp.eq.s32.totalorder %s29, 0
      %p169 = por %p167, %p168
      %p170 = scmp.ne.s32.totalorder %s162, %s164
      %p171 = scmp.eq.s32.totalorder %s34, 1
      %p172 = por %p170, %p171
      %p173 = scmp.ne.s32.totalorder %s164, %s165
      %p174 = scmp.eq.s32.totalorder %s34, 0
      %p175 = por %p173, %p174
      %p176 = scmp.ne.s32.totalorder %s164, %s165
      %p177 = scmp.eq.s32.totalorder %s35, 1
      %p178 = por %p176, %p177
      %p180 = scmp.ne.s32.totalorder %s165, %s179
      %p181 = scmp.eq.s32.totalorder %s35, 0
      %p182 = por %p180, %p181
      %s184 = sadd.s32 %s183, 1
      %p187 = scmp.eq.s32.totalorder %s29, 1
      %p188 = scmp.ne.s32.totalorder %s183, %s185
      %p189 = scmp.eq.s32.totalorder %s29, 0
      %p190 = por %p188, %p189
      %p191 = scmp.ne.s32.totalorder %s183, %s185
      %p192 = scmp.eq.s32.totalorder %s34, 1
      %p193 = por %p191, %p192
      %p194 = scmp.ne.s32.totalorder %s185, %s186
      %p195 = scmp.eq.s32.totalorder %s34, 0
      %p196 = por %p194, %p195
      %p197 = scmp.ne.s32.totalorder %s185, %s186
      %p198 = scmp.eq.s32.totalorder %s35, 1
      %p199 = por %p197, %p198
      %p201 = scmp.ne.s32.totalorder %s186, %s200
      %p202 = scmp.eq.s32.totalorder %s35, 0
      %p203 = por %p201, %p202
      %s205 = sadd.s32 %s204, 1
      %p208 = scmp.eq.s32.totalorder %s29, 1
      %p209 = scmp.ne.s32.totalorder %s204, %s206
      %p210 = scmp.eq.s32.totalorder %s29, 0
      %p211 = por %p209, %p210
      %p212 = scmp.ne.s32.totalorder %s204, %s206
      %p213 = scmp.eq.s32.totalorder %s34, 1
      %p214 = por %p212, %p213
      %p215 = scmp.ne.s32.totalorder %s206, %s207
      %p216 = scmp.eq.s32.totalorder %s34, 0
      %p217 = por %p215, %p216
      %p218 = scmp.ne.s32.totalorder %s206, %s207
      %p219 = scmp.eq.s32.totalorder %s35, 1
      %p220 = por %p218, %p219
      %p222 = scmp.ne.s32.totalorder %s207, %s221
      %p223 = scmp.eq.s32.totalorder %s35, 0
      %p224 = por %p222, %p223
      %s226 = sadd.s32 %s225, 1
      %p229 = scmp.eq.s32.totalorder %s29, 1
      %p230 = scmp.ne.s32.totalorder %s225, %s227
      %p231 = scmp.eq.s32.totalorder %s29, 0
      %p232 = por %p230, %p231
      %p233 = scmp.ne.s32.totalorder %s225, %s227
      %p234 = scmp.eq.s32.totalorder %s34, 1
      %p235 = por %p233, %p234
      %p236 = scmp.ne.s32.totalorder %s227, %s228
      %p237 = scmp.eq.s32.totalorder %s34, 0
      %p238 = por %p236, %p237
      %p239 = scmp.ne.s32.totalorder %s227, %s228
      %p240 = scmp.eq.s32.totalorder %s35, 1
      %p241 = por %p239, %p240
      %p243 = scmp.ne.s32.totalorder %s228, %s242
      %p244 = scmp.eq.s32.totalorder %s35, 0
      %p245 = por %p243, %p244
      %s246 = ssub.s32 %s29, %s36
      %p247 = scmp.eq.s32.totalorder %s246, 0
      %s249 = sadd.s32 %s248, 1
      %s250 = scalar_select %p247, %s248, %s249
      %p253 = pneg %p247
      %p254 = scmp.eq.s32.totalorder %s29, 1
      %p255 = por %p253, %p254
      %p256 = scmp.ne.s32.totalorder %s248, %s251
      %p257 = scmp.eq.s32.totalorder %s29, 0
      %p258 = por %p256, %p257
      %p259 = scmp.ne.s32.totalorder %s248, %s251
      %p260 = scmp.eq.s32.totalorder %s34, 1
      %p261 = por %p259, %p260
      %p262 = scmp.ne.s32.totalorder %s251, %s252
      %p263 = scmp.eq.s32.totalorder %s34, 0
      %p264 = por %p262, %p263
      %p265 = scmp.ne.s32.totalorder %s251, %s252
      %p266 = scmp.eq.s32.totalorder %s35, 1
      %p267 = por %p265, %p266
      %p269 = scmp.ne.s32.totalorder %s252, %s268
      %p270 = scmp.eq.s32.totalorder %s35, 0
      %p271 = por %p269, %p270
      %s272 = ssub.s32 %s29, %s36
      %p273 = scmp.eq.s32.totalorder %s272, 0
      %s275 = sadd.s32 %s274, 1
      %s276 = scalar_select %p273, %s274, %s275
      %p279 = pneg %p273
      %p280 = scmp.eq.s32.totalorder %s29, 1
      %p281 = por %p279, %p280
      %p282 = scmp.ne.s32.totalorder %s274, %s277
      %p283 = scmp.eq.s32.totalorder %s29, 0
      %p284 = por %p282, %p283
      %p285 = scmp.ne.s32.totalorder %s274, %s277
      %p286 = scmp.eq.s32.totalorder %s34, 1
      %p287 = por %p285, %p286
      %p288 = scmp.ne.s32.totalorder %s277, %s278
      %p289 = scmp.eq.s32.totalorder %s34, 0
      %p290 = por %p288, %p289
      %p291 = scmp.ne.s32.totalorder %s277, %s278
      %p292 = scmp.eq.s32.totalorder %s35, 1
      %p293 = por %p291, %p292
      %p295 = scmp.ne.s32.totalorder %s278, %s294
      %p296 = scmp.eq.s32.totalorder %s35, 0
      %p297 = por %p295, %p296
      %s298 = ssub.s32 %s29, %s36
      %p299 = scmp.eq.s32.totalorder %s298, 0
      %s301 = sadd.s32 %s300, 1
      %s302 = scalar_select %p299, %s300, %s301
      %p305 = pneg %p299
      %p306 = scmp.eq.s32.totalorder %s29, 1
      %p307 = por %p305, %p306
      %p308 = scmp.ne.s32.totalorder %s300, %s303
      %p309 = scmp.eq.s32.totalorder %s29, 0
      %p310 = por %p308, %p309
      %p311 = scmp.ne.s32.totalorder %s300, %s303
      %p312 = scmp.eq.s32.totalorder %s34, 1
      %p313 = por %p311, %p312
      %p314 = scmp.ne.s32.totalorder %s303, %s304
      %p315 = scmp.eq.s32.totalorder %s34, 0
      %p316 = por %p314, %p315
      %p317 = scmp.ne.s32.totalorder %s303, %s304
      %p318 = scmp.eq.s32.totalorder %s35, 1
      %p319 = por %p317, %p318
      %p321 = scmp.ne.s32.totalorder %s304, %s320
      %p322 = scmp.eq.s32.totalorder %s35, 0
      %p323 = por %p321, %p322
      %p324 = scmp.le.s32.totalorder 1, %s29
      %p325 = scmp.lt.s32.totalorder %s29, 3
      %p326 = pnand %p324, %p325
      %p327 = pneg %p326
      // Predicated region
      $region9: #{tpu_custom_call.1} parent=5 // pred_check
        _
      $region10: #{tpu_custom_call.1} parent=5 // pred_check_branch
        %329 = sbr.rel (%p326) target = $region12
      $region11: #{tpu_custom_call.1} parent=5 // pred_region
        %s330 = ssub.s32 %s29, 1
        // Predicated region
        $region13: #{tpu_custom_call.1} parent=11 // pred_check
          %p331 = pneg %p154
        $region14: #{tpu_custom_call.1} parent=11 // pred_check_branch
          %333 = sbr.rel (%p331) target = $region16
        $region15: #{tpu_custom_call.1} parent=11 // pred_region
          %s335 = ssub.s32 256, 256
          %336 = vsyncadd [#allocation9], %s335
          %s337 = sshll.u32 [#allocation8], 4
          %s338 = int_to_ptr.vmem [resolvable:$true] %s337
          %343 = dma.hbm_to_vmem [thread:$0]  %s4, 256, %s338, [#allocation9], 64, 64, 4
        $region16: #{tpu_custom_call.1} parent=11 // pred_fallthru
          _
        // Predicated region
        $region17: #{tpu_custom_call.1} parent=11 // pred_check
          %p344 = pneg %p175
        $region18: #{tpu_custom_call.1} parent=11 // pred_check_branch
          %346 = sbr.rel (%p344) target = $region20
        $region19: #{tpu_custom_call.1} parent=11 // pred_region
          %s348 = ssub.s32 256, 256
          %349 = vsyncadd [#allocation9], %s348
          %s350 = sshll.u32 [#allocation10], 4
          %s351 = int_to_ptr.vmem [resolvable:$true] %s350
          %356 = dma.hbm_to_vmem [thread:$0]  %s5, 256, %s351, [#allocation9], 64, 64, 4
        $region20: #{tpu_custom_call.1} parent=11 // pred_fallthru
          _
        // Predicated region
        $region21: #{tpu_custom_call.1} parent=11 // pred_check
          %p357 = pneg %p196
        $region22: #{tpu_custom_call.1} parent=11 // pred_check_branch
          %359 = sbr.rel (%p357) target = $region24
        $region23: #{tpu_custom_call.1} parent=11 // pred_region
          %s361 = ssub.s32 16, 16
          %362 = vsyncadd [#allocation12], %s361
          %s364 = sshll.u32 [#allocation11], 4
          %s365 = int_to_ptr.vmem [resolvable:$true] %s364
          %367 = dma.hbm_to_vmem [thread:$0]  %s6, 16, %s365, [#allocation12]
        $region24: #{tpu_custom_call.1} parent=11 // pred_fallthru
          _
        // Predicated region
        $region25: #{tpu_custom_call.1} parent=11 // pred_check
          %p368 = pneg %p217
        $region26: #{tpu_custom_call.1} parent=11 // pred_check_branch
          %370 = sbr.rel (%p368) target = $region28
        $region27: #{tpu_custom_call.1} parent=11 // pred_region
          _
        $region28: #{tpu_custom_call.1} parent=11 // pred_fallthru
          _
        // Predicated region
        $region29: #{tpu_custom_call.1} parent=11 // pred_check
          %p371 = pneg %p238
        $region30: #{tpu_custom_call.1} parent=11 // pred_check_branch
          %373 = sbr.rel (%p371) target = $region32
        $region31: #{tpu_custom_call.1} parent=11 // pred_region
          _
        $region32: #{tpu_custom_call.1} parent=11 // pred_fallthru
          _
      $region12: #{tpu_custom_call.1} parent=5 // pred_fallthru
        _
      %p374 = scmp.lt.s32.totalorder %s29, 2
      // Predicated region
      $region33: #{tpu_custom_call.1} parent=5 // pred_check
        %p375 = pneg %p374
      $region34: #{tpu_custom_call.1} parent=5 // pred_check_branch
        %377 = sbr.rel (%p375) target = $region36
      $region35: #{tpu_custom_call.1} parent=5 // pred_region
        // Predicated region
        $region37: #{tpu_custom_call.1} parent=35 // pred_check
          %p378 = pneg %p49
        $region38: #{tpu_custom_call.1} parent=35 // pred_check_branch
          %380 = sbr.rel (%p378) target = $region40
        $region39: #{tpu_custom_call.1} parent=35 // pred_region
          %s381 = smul.u32 2, %s29
          %p382 = scmp.lt.s32.totalorder %s381, 3
          %s383 = scalar_select %p382, %s381, 3
          %s384 = smul.addr %s383, 4
          %s385 = scalar_lea.vmem %s0, %s384
          %s386 = smul.u32 2, %s29
        $region40: #{tpu_custom_call.1} parent=35 // pred_fallthru
          _
        // Predicated region
        $region41: #{tpu_custom_call.1} parent=35 // pred_check
          %p387 = pneg %p75
        $region42: #{tpu_custom_call.1} parent=35 // pred_check_branch
          %389 = sbr.rel (%p387) target = $region44
        $region43: #{tpu_custom_call.1} parent=35 // pred_region
          %s390 = smul.u32 2, %s29
          %p391 = scmp.lt.s32.totalorder %s390, 3
          %s392 = scalar_select %p391, %s390, 3
          %s393 = smul.addr %s392, 4
          %s394 = scalar_lea.vmem %s1, %s393
          %s395 = smul.u32 2, %s29
        $region44: #{tpu_custom_call.1} parent=35 // pred_fallthru
          _
        // Predicated region
        $region45: #{tpu_custom_call.1} parent=35 // pred_check
          %p396 = pneg %p101
        $region46: #{tpu_custom_call.1} parent=35 // pred_check_branch
          %398 = sbr.rel (%p396) target = $region48
        $region47: #{tpu_custom_call.1} parent=35 // pred_region
          %s399 = smul.u32 2, %s29
          %p400 = scmp.lt.s32.totalorder %s399, 3
          %s401 = scalar_select %p400, %s399, 3
          %s402 = smul.addr %s401, 8
          %s403 = scalar_lea.vmem %s2, %s402
          %s404 = smul.u32 2, %s29
        $region48: #{tpu_custom_call.1} parent=35 // pred_fallthru
          _
        // Predicated region
        $region49: #{tpu_custom_call.1} parent=35 // pred_check
          %p405 = pneg %p127
        $region50: #{tpu_custom_call.1} parent=35 // pred_check_branch
          %407 = sbr.rel (%p405) target = $region52
        $region51: #{tpu_custom_call.1} parent=35 // pred_region
          %s408 = sand.u32 %s117, 1
          %s409 = scalar_lea.sflag [#allocation6], %s408
          %s410 = sand.u32 %s117, 1
          %s411 = smul.addr %s410, 2
          %s412 = scalar_lea.vmem [#allocation5], %s411
          %s413 = smul.u32 2, %s29
          %s415 = ssub.s32 32, 32
          %416 = vsyncadd %s409, %s415
          %s417 = smul.addr %s413, 16
          %s418 = scalar_lea.hbm %s3, %s417
          %s419 = sshll.u32 %s412, 4
          %s420 = int_to_ptr.vmem [resolvable:$true] %s419
          %425 = dma.hbm_to_vmem [thread:$0]  %s418, 32, %s420, %s409, 16, 16, 1
        $region52: #{tpu_custom_call.1} parent=35 // pred_fallthru
          _
      $region36: #{tpu_custom_call.1} parent=5 // pred_fallthru
        _
      %p426 = scmp.le.s32.totalorder 1, %s29
      %p427 = scmp.lt.s32.totalorder %s29, 3
      %p428 = pnand %p426, %p427
      %p429 = pneg %p428
      // Predicated region
      $region53: #{tpu_custom_call.1} parent=5 // pred_check
        _
      $region54: #{tpu_custom_call.1} parent=5 // pred_check_branch
        %431 = sbr.rel (%p428) target = $region56
      $region55: #{tpu_custom_call.1} parent=5 // pred_region
        %s432 = ssub.s32 %s29, 1
        %s433 = sand.u32 %s120, 1
        %s434 = scalar_lea.sflag [#allocation6], %s433
        %s435 = sand.u32 %s120, 1
        %s436 = smul.addr %s435, 2
        %s437 = scalar_lea.vmem [#allocation5], %s436
        // Predicated region
        $region57: #{tpu_custom_call.1} parent=55 // pred_check
          %p438 = pneg %p133
        $region58: #{tpu_custom_call.1} parent=55 // pred_check_branch
          %440 = sbr.rel (%p438) target = $region60
        $region59: #{tpu_custom_call.1} parent=55 // pred_region
          %441 = dma.done %s434, 32
        $region60: #{tpu_custom_call.1} parent=55 // pred_fallthru
          _
        // Predicated region
        $region61: #{tpu_custom_call.1} parent=55 // pred_check
          %p442 = pneg %p154
        $region62: #{tpu_custom_call.1} parent=55 // pred_check_branch
          %444 = sbr.rel (%p442) target = $region64
        $region63: #{tpu_custom_call.1} parent=55 // pred_region
          %445 = dma.done [#allocation9], 256
        $region64: #{tpu_custom_call.1} parent=55 // pred_fallthru
          _
        // Predicated region
        $region65: #{tpu_custom_call.1} parent=55 // pred_check
          %p446 = pneg %p175
        $region66: #{tpu_custom_call.1} parent=55 // pred_check_branch
          %448 = sbr.rel (%p446) target = $region68
        $region67: #{tpu_custom_call.1} parent=55 // pred_region
          %449 = dma.done [#allocation9], 256
        $region68: #{tpu_custom_call.1} parent=55 // pred_fallthru
          _
        // Predicated region
        $region69: #{tpu_custom_call.1} parent=55 // pred_check
          %p450 = pneg %p196
        $region70: #{tpu_custom_call.1} parent=55 // pred_check_branch
          %452 = sbr.rel (%p450) target = $region72
        $region71: #{tpu_custom_call.1} parent=55 // pred_region
          %453 = dma.done [#allocation12], 16
        $region72: #{tpu_custom_call.1} parent=55 // pred_fallthru
          _
        %s454 = smul.u32 2, %s34
        %p455 = scmp.lt.s32.totalorder %s454, 3
        %s456 = scalar_select %p455, %s454, 3
        %s457 = smul.addr %s456, 4
        %s458 = scalar_lea.vmem %s0, %s457
        %p459 = pneg %p55
        %p460 = pneg %p52
        %s461 = smul.u32 2, %s34
        %p462 = scmp.lt.s32.totalorder %s461, 3
        %s463 = scalar_select %p462, %s461, 3
        %s464 = smul.addr %s463, 4
        %s465 = scalar_lea.vmem %s1, %s464
        %p466 = pneg %p81
        %p467 = pneg %p78
        %s468 = smul.u32 2, %s34
        %p469 = scmp.lt.s32.totalorder %s468, 3
        %s470 = scalar_select %p469, %s468, 3
        %s471 = smul.addr %s470, 8
        %s472 = scalar_lea.vmem %s2, %s471
        %p473 = pneg %p107
        %p474 = pneg %p104
        %s475 = sand.u32 %s120, 1
        %s476 = scalar_lea.sflag [#allocation6], %s475
        %s477 = sand.u32 %s120, 1
        %s478 = smul.addr %s477, 2
        %s479 = scalar_lea.vmem [#allocation5], %s478
        %p480 = pneg %p133
        %p481 = pneg %p130
        %p482 = pneg %p154
        %p483 = pneg %p151
        %p484 = pneg %p175
        %p485 = pneg %p172
        %p486 = pneg %p196
        %p487 = pneg %p193
        %p488 = pneg %p217
        %p489 = pneg %p214
        %p490 = pneg %p238
        %p491 = pneg %p235
        %p492 = pneg %p264
        %p493 = pneg %p261
        %s494 = sand.u32 %s251, 1
        %s495 = scalar_lea.sflag [#allocation7], %s494
        %s496 = sand.u32 %s251, 1
        %s497 = smul.addr %s496, 8
        %s498 = scalar_lea.vmem [#allocation13], %s497
        %p499 = pneg %p290
        %p500 = pneg %p287
        %s501 = sand.u32 %s34, 1
        %s502 = scalar_lea.sflag [#allocation15], %s501
        %s503 = sand.u32 %s277, 1
        %s504 = smul.addr %s503, 8
        %s505 = scalar_lea.vmem [#allocation14], %s504
        %p506 = pneg %p316
        %p507 = pneg %p313
        %s508 = sand.u32 %s34, 1
        %s509 = scalar_lea.sflag [#allocation15], %s508
        %s510 = sand.u32 %s303, 1
        %s511 = scalar_lea.vmem [#allocation16], %s510
        %s512 = smul.u32 2, %s34
        %p513 = scmp.lt.s32.totalorder %s512, 3
        %s514 = scalar_select %p513, %s512, 3
        %s515 = smul.addr %s514, 4
        %s516 = scalar_lea.vmem %s0, %s515
        %s517 = smul.u32 2, %s34
        %s518 = smul.u32 2, %s34
        %p519 = scmp.lt.s32.totalorder %s518, 3
        %s520 = scalar_select %p519, %s518, 3
        %s521 = smul.addr %s520, 4
        %s522 = scalar_lea.vmem %s1, %s521
        %s523 = smul.u32 2, %s34
        %s524 = smul.u32 2, %s34
        %p525 = scmp.lt.s32.totalorder %s524, 3
        %s526 = scalar_select %p525, %s524, 3
        %s527 = smul.addr %s526, 8
        %s528 = scalar_lea.vmem %s2, %s527
        %s529 = smul.u32 2, %s34
        %s530 = smul.u32 2, %s34
        %s531 = smul.u32 2, %s34
        %s532 = smul.u32 2, %s34
        %v534 = vld [vmem:[%s516] sm:$0xf]
        %v535 = vld [vmem:[%s516 + $0x4] sm:$0xf]
        %v536 = vld [vmem:[#allocation8] sm:$0xf]
        %v537 = vld [vmem:[#allocation8 + $0x4] sm:$0xf]
        %v538 = vld [vmem:[#allocation8 + $0x8] sm:$0xf]
        %v539 = vld [vmem:[#allocation8 + $0xc] sm:$0xf]
        %v542 = vunpack.c.l.b16 %v534
        %v543 = vunpack.c.l.b16 %v535
        %v544 = vpack.c.b16 %v543, %v542
        %v549 = vunpack.c.l.b16 %v536
        %v550 = vunpack.c.l.b16 %v537
        %v551 = vunpack.c.l.b16 %v538
        %v552 = vunpack.c.l.b16 %v539
        %v553 = vpack.c.b16 %v550, %v549
        %v554 = vpack.c.b16 %v552, %v551
        %vm557 = vcmask 261120
        %v559 = vsel %vm557, %v544, 0
        %561 = vmatprep.subr.bf16.mxu0 0
        %562 = vmatpush1.bf16.msra.mxu0 0
        %563 = vmatprep.subr.bf16.mxu0 0
        %564 = vmatpush1.bf16.msra.mxu0 0
        %565 = vmatprep.subr.bf16.mxu0 0
        %566 = vmatpush1.bf16.msra.mxu0 0
        %567 = vmatprep.subr.bf16.mxu0 0
        %568 = vmatpush1.bf16.msra.mxu0 0
        %569 = vmatprep.subr.bf16.mxu0 0
        %570 = vmatpush1.bf16.msra.mxu0 0
        %571 = vmatprep.subr.bf16.mxu0 0
        %572 = vmatpush1.bf16.msra.mxu0 0
        %573 = vmatprep.subr.bf16.mxu0 0
        %574 = vmatpush1.bf16.msra.mxu0 %v554
        %575 = vmatprep.subr.bf16.mxu0 0
        %576 = vmatpush1.bf16.msra.mxu0 %v553
        %577 = vmatprep.subr.bf16.mxu0 0
        %578 = vmatpush2.bf16.msra.mxu0 0
        %579 = vmatprep.subr.bf16.mxu0 0
        %580 = vmatpush2.bf16.msra.mxu0 0
        %581 = vmatprep.subr.bf16.mxu0 0
        %582 = vmatpush2.bf16.msra.mxu0 0
        %583 = vmatprep.subr.bf16.mxu0 0
        %584 = vmatpush2.bf16.msra.mxu0 0
        %585 = vmatprep.subr.bf16.mxu0 0
        %586 = vmatpush2.bf16.msra.mxu0 0
        %587 = vmatprep.subr.bf16.mxu0 0
        %588 = vmatpush2.bf16.msra.mxu0 0
        %589 = vmatprep.subr.bf16.mxu0 0
        %590 = vmatpush2.bf16.msra.mxu0 0
        %591 = vmatprep.subr.bf16.mxu0 0
        %592 = vmatpush2.bf16.msra.mxu0 0
        %593 = vmatprep.mubr.bf16.mxu0 0
        %594 = vmatmul.mubr.bf16.gmra.mxu0 %v559
        %v595 = vpop.f32.mrf.mxu0
        %v596 = vadd.f32 0.0, %v595
        %v597 = vpop.f32.mrf.mxu0
        %v598 = vpop.f32.mrf.mxu0
        %v599 = vadd.f32 0.0, %v598
        %v600 = vpop.f32.mrf.mxu0
        %601 = vdwg.mxu0
        %602 = vst.msk [vmem:[#allocation2] sm:$0xff] %vm557, %v596
        %603 = vst.msk [vmem:[#allocation2 + $0x8] sm:$0xff] %vm557, %v599
        loop: start=0, step=1, limit=2
        $region73: #{tpu_custom_call.1} parent=55 // loop_pre_header
          _
        $region74: #{tpu_custom_call.1} parent=55 // loop_header
          %s605 = sphi 0, %s609
          %p606 = scmp.ge.s32.totalorder %s605, 2
        $region75: #{tpu_custom_call.1} parent=55 // loop_header_branch
          %608 = sbr.rel (%p606) target = $region79
        $region76: #{tpu_custom_call.1} parent=55 // loop_body
          %s610 = smul.u32 %s605, 8
          %s611 = scalar_lea.vmem [#allocation2], %s610
          %v612 = vld [vmem:[%s611] sm:$0xff]
          %v613 = vpack.c.bf16 %v612, %v612
          %s614 = sshra.s32 %s610, 3
          %s615 = sand.u32 %s610, 7
          %s616 = smul.addr %s614, 4
          %s617 = scalar_lea.vmem %s522, %s616
          %v618 = vld [vmem:[%s617] sm:$0xf]
          %s619 = scalar_lea.vmem %s528, %s610
          %v620 = vld [vmem:[%s619] sm:$0xff]
          %s621 = scalar_lea.vmem %s437, %s605 [#allocation5]
          %v622 = vld [vmem:[%s621] sm:$0x1]
          %624 = vset.pattern.permute.xlu0 0
          %625 = vperm.xlu0 %624, %v620
          %v626 = vpop.permute.xlu0 %625
          %v629 = vlaneseq
          %v630 = vshrl.u32 %v629, 7
          %v631 = vsub.s32 0, %v630
          %v632 = vrot.slane %v622, %v631
          %v634 = vmul.f32 %v626, %v632
          %v635 = vsub.f32 %v634, 100000.0
          %v637 = vsel %vm557, %v613, 0
          %v640 = vsel %vm557, %v618, 0
          %642 = vmatprep.subr.bf16.mxu0 0
          %643 = vmatpush1.bf16.xpose.msra.mxu0 0
          %644 = vmatprep.subr.bf16.mxu0 0
          %645 = vmatpush1.bf16.xpose.msra.mxu0 0
          %646 = vmatprep.subr.bf16.mxu0 0
          %647 = vmatpush1.bf16.xpose.msra.mxu0 0
          %648 = vmatprep.subr.bf16.mxu0 0
          %649 = vmatpush1.bf16.xpose.msra.mxu0 0
          %650 = vmatprep.subr.bf16.mxu0 0
          %651 = vmatpush1.bf16.xpose.msra.mxu0 0
          %652 = vmatprep.subr.bf16.mxu0 0
          %653 = vmatpush1.bf16.xpose.msra.mxu0 0
          %654 = vmatprep.subr.bf16.mxu0 0
          %655 = vmatpush1.bf16.xpose.msra.mxu0 0
          %656 = vmatprep.subr.bf16.mxu0 0
          %657 = vmatpush1.bf16.xpose.msra.mxu0 %v640
          %658 = vmatprep.subr.bf16.mxu0 0
          %659 = vmatpush2.bf16.xpose.msra.mxu0 0
          %660 = vmatprep.subr.bf16.mxu0 0
          %661 = vmatpush2.bf16.xpose.msra.mxu0 0
          %662 = vmatprep.subr.bf16.mxu0 0
          %663 = vmatpush2.bf16.xpose.msra.mxu0 0
          %664 = vmatprep.subr.bf16.mxu0 0
          %665 = vmatpush2.bf16.xpose.msra.mxu0 0
          %666 = vmatprep.subr.bf16.mxu0 0
          %667 = vmatpush2.bf16.xpose.msra.mxu0 0
          %668 = vmatprep.subr.bf16.mxu0 0
          %669 = vmatpush2.bf16.xpose.msra.mxu0 0
          %670 = vmatprep.subr.bf16.mxu0 0
          %671 = vmatpush2.bf16.xpose.msra.mxu0 0
          %672 = vmatprep.subr.bf16.mxu0 0
          %673 = vmatpush2.bf16.xpose.msra.mxu0 0
          %674 = vmatprep.mubr.bf16.mxu0 0
          %675 = vmatmul.mubr.bf16.gmra.mxu0 %v637
          %v676 = vpop.f32.mrf.mxu0
          %v677 = vadd.f32 %v635, %v676
          %v678 = vpop.f32.mrf.mxu0
          %v679 = vpop.f32.mrf.mxu0
          %v680 = vpop.f32.mrf.mxu0
          %681 = vdwg.mxu0
          %vm682 = vcmask 64512
          %v683 = vsel %vm682, %v677, -inf
          %684 = vmax.xlane.f32.xlu0 %v683
          %v685 = vpop.xlane.xlu0 %684
          %v686 = vsub.f32 %v677, %v685
          %v687 = vmul.f32 %v686, 1.442695
          %v688 = vpow.pop %v687
          %v689 = vsel %vm682, %v688, 0.0
          %690 = vadd.xlane.f32.xlu0 %v689
          %v691 = vpop.xlane.xlu0 %690
          %v692 = vrcp.pop %v691
          %v693 = vmul.f32 %v688, %v692
          %v694 = vrot.slane %v683, 4
          %v695 = vmax.f32 %v683, %v694
          %v696 = vrot.slane %v695, 2
          %v697 = vmax.f32 %v695, %v696
          %v698 = vrot.slane %v697, 1
          %v699 = vmax.f32 %v697, %v698
          %v700 = vsub.f32 %v677, %v699
          %v701 = vmul.f32 %v700, 1.442695
          %v702 = vpow.pop %v701
          %v703 = vsel %vm682, %v702, 0.0
          %v704 = vrot.slane %v703, 4
          %v705 = vadd.f32 %v703, %v704
          %v706 = vrot.slane %v705, 2
          %v707 = vadd.f32 %v705, %v706
          %v708 = vrot.slane %v707, 1
          %v709 = vadd.f32 %v707, %v708
          %v710 = vrcp.pop %v709
          %v711 = vmul.f32 %v702, %v710
          %v712 = vpack.c.bf16 %v693, %v693
          %v714 = vsel %vm682, %v712, 0
          %vm716 = vcmask 1043456
          %v717 = vsel %vm716, %v618, 0
          %719 = vmatprep.subr.bf16.mxu0 0
          %720 = vmatpush1.bf16.msra.mxu0 0
          %721 = vmatprep.subr.bf16.mxu0 0
          %722 = vmatpush1.bf16.msra.mxu0 0
          %723 = vmatprep.subr.bf16.mxu0 0
          %724 = vmatpush1.bf16.msra.mxu0 0
          %725 = vmatprep.subr.bf16.mxu0 0
          %726 = vmatpush1.bf16.msra.mxu0 0
          %727 = vmatprep.subr.bf16.mxu0 0
          %728 = vmatpush1.bf16.msra.mxu0 0
          %729 = vmatprep.subr.bf16.mxu0 0
          %730 = vmatpush1.bf16.msra.mxu0 0
          %731 = vmatprep.subr.bf16.mxu0 0
          %732 = vmatpush1.bf16.msra.mxu0 0
          %733 = vmatprep.subr.bf16.mxu0 0
          %734 = vmatpush1.bf16.msra.mxu0 %v717
          %735 = vmatprep.subr.bf16.mxu0 0
          %736 = vmatpush2.bf16.msra.mxu0 0
          %737 = vmatprep.subr.bf16.mxu0 0
          %738 = vmatpush2.bf16.msra.mxu0 0
          %739 = vmatprep.subr.bf16.mxu0 0
          %740 = vmatpush2.bf16.msra.mxu0 0
          %741 = vmatprep.subr.bf16.mxu0 0
          %742 = vmatpush2.bf16.msra.mxu0 0
          %743 = vmatprep.subr.bf16.mxu0 0
          %744 = vmatpush2.bf16.msra.mxu0 0
          %745 = vmatprep.subr.bf16.mxu0 0
          %746 = vmatpush2.bf16.msra.mxu0 0
          %747 = vmatprep.subr.bf16.mxu0 0
          %748 = vmatpush2.bf16.msra.mxu0 0
          %749 = vmatprep.subr.bf16.mxu0 0
          %750 = vmatpush2.bf16.msra.mxu0 0
          %751 = vmatprep.mubr.bf16.mxu0 0
          %752 = vmatmul.mubr.bf16.gmra.mxu0 %v714
          %v753 = vpop.f32.mrf.mxu0
          %v754 = vadd.f32 0.0, %v753
          %v755 = vpop.f32.mrf.mxu0
          %v756 = vpop.f32.mrf.mxu0
          %v757 = vpop.f32.mrf.mxu0
          %758 = vdwg.mxu0
          %v759 = vpack.c.bf16 %v711, %v711
          %760 = vxpose.xlu0.c.b16.start [1/8] %v759, 128
          %761 = vxpose.xlu0.c.b16.cont [2/8] 0, 128
          %762 = vxpose.xlu0.c.b16.cont [3/8] 0, 128
          %763 = vxpose.xlu0.c.b16.cont [4/8] 0, 128
          %764 = vxpose.xlu0.c.b16.cont [5/8] 0, 128
          %765 = vxpose.xlu0.c.b16.cont [6/8] 0, 128
          %766 = vxpose.xlu0.c.b16.cont [7/8] 0, 128
          %767 = vxpose.xlu0.c.b16.end [8/8] 0, 128
          %v768 = vpop.trf.xlu0
          %v769 = vpop.trf.xlu0
          %v770 = vpop.trf.xlu0
          %v771 = vpop.trf.xlu0
          %v772 = vpop.trf.xlu0
          %v773 = vpop.trf.xlu0
          %v774 = vpop.trf.xlu0
          %v775 = vpop.trf.xlu0
          %v777 = vsel %vm682, %v768, 0
          %v779 = vsel %vm716, %v613, 0
          %781 = vmatprep.subr.bf16.mxu0 0
          %782 = vmatpush1.bf16.msra.mxu0 0
          %783 = vmatprep.subr.bf16.mxu0 0
          %784 = vmatpush1.bf16.msra.mxu0 0
          %785 = vmatprep.subr.bf16.mxu0 0
          %786 = vmatpush1.bf16.msra.mxu0 0
          %787 = vmatprep.subr.bf16.mxu0 0
          %788 = vmatpush1.bf16.msra.mxu0 0
          %789 = vmatprep.subr.bf16.mxu0 0
          %790 = vmatpush1.bf16.msra.mxu0 0
          %791 = vmatprep.subr.bf16.mxu0 0
          %792 = vmatpush1.bf16.msra.mxu0 0
          %793 = vmatprep.subr.bf16.mxu0 0
          %794 = vmatpush1.bf16.msra.mxu0 0
          %795 = vmatprep.subr.bf16.mxu0 0
          %796 = vmatpush1.bf16.msra.mxu0 %v779
          %797 = vmatprep.subr.bf16.mxu0 0
          %798 = vmatpush2.bf16.msra.mxu0 0
          %799 = vmatprep.subr.bf16.mxu0 0
          %800 = vmatpush2.bf16.msra.mxu0 0
          %801 = vmatprep.subr.bf16.mxu0 0
          %802 = vmatpush2.bf16.msra.mxu0 0
          %803 = vmatprep.subr.bf16.mxu0 0
          %804 = vmatpush2.bf16.msra.mxu0 0
          %805 = vmatprep.subr.bf16.mxu0 0
          %806 = vmatpush2.bf16.msra.mxu0 0
          %807 = vmatprep.subr.bf16.mxu0 0
          %808 = vmatpush2.bf16.msra.mxu0 0
          %809 = vmatprep.subr.bf16.mxu0 0
          %810 = vmatpush2.bf16.msra.mxu0 0
          %811 = vmatprep.subr.bf16.mxu0 0
          %812 = vmatpush2.bf16.msra.mxu0 0
          %813 = vmatprep.mubr.bf16.mxu0 0
          %814 = vmatmul.mubr.bf16.gmra.mxu0 %v777
          %v815 = vpop.f32.mrf.mxu0
          %v816 = vadd.f32 0.0, %v815
          %v817 = vpop.f32.mrf.mxu0
          %v818 = vpop.f32.mrf.mxu0
          %v819 = vpop.f32.mrf.mxu0
          %820 = vdwg.mxu0
          %v821 = vsub.f32 %v612, %v754
          %s822 = scalar_lea.vmem [#allocation3], %s610
          %823 = vst.msk [vmem:[%s822] sm:$0xff] %vm557, %v821
          %v824 = vunpack.c.l.bf16 %v618
          %v825 = vsub.f32 %v824, %v816
          %s826 = scalar_lea.vmem [#allocation4], %s610
          %827 = vst.msk [vmem:[%s826] sm:$0xff] %vm557, %v825
        $region77: #{tpu_custom_call.1} parent=55 // loop_footer
          %s609 = sadd.s32 1, %s605
        $region78: #{tpu_custom_call.1} parent=55 // loop_footer_branch
          %604 = sbr.rel target = $region74
        $region79: #{tpu_custom_call.1} parent=55 // loop_exit
          _
        %v828 = vld [vmem:[#allocation3] sm:$0xff]
        %v829 = vld [vmem:[#allocation3 + $0x8] sm:$0xff]
        %v830 = vpack.c.bf16 %v829, %v828
        %v831 = vld [vmem:[#allocation10] sm:$0xf]
        %v832 = vld [vmem:[#allocation10 + $0x4] sm:$0xf]
        %v833 = vld [vmem:[#allocation10 + $0x8] sm:$0xf]
        %v834 = vld [vmem:[#allocation10 + $0xc] sm:$0xf]
        %v835 = vld [vmem:[#allocation11] sm:$0x1]
        %v837 = vlaneseq
        %v838 = vshrl.u32 %v837, 7
        %v839 = vsub.s32 0, %v838
        %v840 = vrot.slane %v835, %v839
        %v846 = vunpack.c.l.b16 %v831
        %v847 = vunpack.c.l.b16 %v832
        %v848 = vunpack.c.l.b16 %v833
        %v849 = vunpack.c.l.b16 %v834
        %v850 = vpack.c.b16 %v847, %v846
        %v851 = vpack.c.b16 %v849, %v848
        %v855 = vsel %vm557, %v830, 0
        %857 = vmatprep.subr.bf16.mxu0 0
        %858 = vmatpush1.bf16.msra.mxu0 0
        %859 = vmatprep.subr.bf16.mxu0 0
        %860 = vmatpush1.bf16.msra.mxu0 0
        %861 = vmatprep.subr.bf16.mxu0 0
        %862 = vmatpush1.bf16.msra.mxu0 0
        %863 = vmatprep.subr.bf16.mxu0 0
        %864 = vmatpush1.bf16.msra.mxu0 0
        %865 = vmatprep.subr.bf16.mxu0 0
        %866 = vmatpush1.bf16.msra.mxu0 0
        %867 = vmatprep.subr.bf16.mxu0 0
        %868 = vmatpush1.bf16.msra.mxu0 0
        %869 = vmatprep.subr.bf16.mxu0 0
        %870 = vmatpush1.bf16.msra.mxu0 %v851
        %871 = vmatprep.subr.bf16.mxu0 0
        %872 = vmatpush1.bf16.msra.mxu0 %v850
        %873 = vmatprep.subr.bf16.mxu0 0
        %874 = vmatpush2.bf16.msra.mxu0 0
        %875 = vmatprep.subr.bf16.mxu0 0
        %876 = vmatpush2.bf16.msra.mxu0 0
        %877 = vmatprep.subr.bf16.mxu0 0
        %878 = vmatpush2.bf16.msra.mxu0 0
        %879 = vmatprep.subr.bf16.mxu0 0
        %880 = vmatpush2.bf16.msra.mxu0 0
        %881 = vmatprep.subr.bf16.mxu0 0
        %882 = vmatpush2.bf16.msra.mxu0 0
        %883 = vmatprep.subr.bf16.mxu0 0
        %884 = vmatpush2.bf16.msra.mxu0 0
        %885 = vmatprep.subr.bf16.mxu0 0
        %886 = vmatpush2.bf16.msra.mxu0 0
        %887 = vmatprep.subr.bf16.mxu0 0
        %888 = vmatpush2.bf16.msra.mxu0 0
        %889 = vmatprep.mubr.bf16.mxu0 0
        %890 = vmatmul.mubr.bf16.gmra.mxu0 %v855
        %v891 = vpop.f32.mrf.mxu0
        %v892 = vadd.f32 %v840, %v891
        %v893 = vpop.f32.mrf.mxu0
        %v894 = vpop.f32.mrf.mxu0
        %v895 = vadd.f32 %v840, %v894
        %v896 = vpop.f32.mrf.mxu0
        %897 = vdwg.mxu0
        %v898 = vld [vmem:[#allocation4] sm:$0xff]
        %v899 = vld [vmem:[#allocation4 + $0x8] sm:$0xff]
        %v900 = vpack.c.bf16 %v899, %v898
        %v901 = vld [vmem:[%s7] sm:$0xf]
        %v902 = vld [vmem:[%s7 + $0x4] sm:$0xf]
        %v903 = vld [vmem:[%s7 + $0x8] sm:$0xf]
        %v904 = vld [vmem:[%s7 + $0xc] sm:$0xf]
        %v905 = vld [vmem:[%s8] sm:$0x1]
        %v907 = vlaneseq
        %v908 = vshrl.u32 %v907, 7
        %v909 = vsub.s32 0, %v908
        %v910 = vrot.slane %v905, %v909
        %v916 = vunpack.c.l.b16 %v901
        %v917 = vunpack.c.l.b16 %v902
        %v918 = vunpack.c.l.b16 %v903
        %v919 = vunpack.c.l.b16 %v904
        %v920 = vpack.c.b16 %v917, %v916
        %v921 = vpack.c.b16 %v919, %v918
        %v925 = vsel %vm557, %v900, 0
        %927 = vmatprep.subr.bf16.mxu0 0
        %928 = vmatpush1.bf16.msra.mxu0 0
        %929 = vmatprep.subr.bf16.mxu0 0
        %930 = vmatpush1.bf16.msra.mxu0 0
        %931 = vmatprep.subr.bf16.mxu0 0
        %932 = vmatpush1.bf16.msra.mxu0 0
        %933 = vmatprep.subr.bf16.mxu0 0
        %934 = vmatpush1.bf16.msra.mxu0 0
        %935 = vmatprep.subr.bf16.mxu0 0
        %936 = vmatpush1.bf16.msra.mxu0 0
        %937 = vmatprep.subr.bf16.mxu0 0
        %938 = vmatpush1.bf16.msra.mxu0 0
        %939 = vmatprep.subr.bf16.mxu0 0
        %940 = vmatpush1.bf16.msra.mxu0 %v921
        %941 = vmatprep.subr.bf16.mxu0 0
        %942 = vmatpush1.bf16.msra.mxu0 %v920
        %943 = vmatprep.subr.bf16.mxu0 0
        %944 = vmatpush2.bf16.msra.mxu0 0
        %945 = vmatprep.subr.bf16.mxu0 0
        %946 = vmatpush2.bf16.msra.mxu0 0
        %947 = vmatprep.subr.bf16.mxu0 0
        %948 = vmatpush2.bf16.msra.mxu0 0
        %949 = vmatprep.subr.bf16.mxu0 0
        %950 = vmatpush2.bf16.msra.mxu0 0
        %951 = vmatprep.subr.bf16.mxu0 0
        %952 = vmatpush2.bf16.msra.mxu0 0
        %953 = vmatprep.subr.bf16.mxu0 0
        %954 = vmatpush2.bf16.msra.mxu0 0
        %955 = vmatprep.subr.bf16.mxu0 0
        %956 = vmatpush2.bf16.msra.mxu0 0
        %957 = vmatprep.subr.bf16.mxu0 0
        %958 = vmatpush2.bf16.msra.mxu0 0
        %959 = vmatprep.mubr.bf16.mxu0 0
        %960 = vmatmul.mubr.bf16.gmra.mxu0 %v925
        %v961 = vpop.f32.mrf.mxu0
        %v962 = vadd.f32 %v910, %v961
        %v963 = vpop.f32.mrf.mxu0
        %v964 = vpop.f32.mrf.mxu0
        %v965 = vadd.f32 %v910, %v964
        %v966 = vpop.f32.mrf.mxu0
        %967 = vdwg.mxu0
        %v968 = vxor.u32 %v892, 2147483648
        %v969 = vxor.u32 %v895, 2147483648
        %v970 = vmul.f32 %v968, 1.442695
        %v971 = vpow.pop %v970
        %v972 = vmul.f32 %v969, 1.442695
        %v973 = vpow.pop %v972
        %v974 = vadd.f32 %v971, 1.0
        %v975 = vadd.f32 %v973, 1.0
        %v976 = vrcp.pop %v974
        %v977 = vmul.f32 1.0, %v976
        %v978 = vrcp.pop %v975
        %v979 = vmul.f32 1.0, %v978
        %v980 = vxor.u32 %v962, 2147483648
        %v981 = vxor.u32 %v965, 2147483648
        %v982 = vmul.f32 %v980, 1.442695
        %v983 = vpow.pop %v982
        %v984 = vmul.f32 %v981, 1.442695
        %v985 = vpow.pop %v984
        %v986 = vadd.f32 %v983, 1.0
        %v987 = vadd.f32 %v985, 1.0
        %v988 = vrcp.pop %v986
        %v989 = vmul.f32 1.0, %v988
        %v990 = vrcp.pop %v987
        %v991 = vmul.f32 1.0, %v990
        %v992 = vld [vmem:[#allocation2] sm:$0xff]
        %v993 = vld [vmem:[#allocation2 + $0x8] sm:$0xff]
        %v994 = vsub.f32 1.0, %v977
        %v995 = vsub.f32 1.0, %v979
        %v996 = vmul.f32 %v992, %v994
        %v997 = vmul.f32 %v993, %v995
        %v998 = vpack.c.bf16 %v997, %v996
        %v1000 = vunpack.c.l.b16 %v998
        %v1001 = vunpack.c.h.b16 %v998
        %v1002 = vpack.c.b16 %v1000, %v1000
        %v1003 = vpack.c.b16 %v1001, %v1001
        %vm1006 = vcmask 257024
        %1007 = vst.msk [vmem:[%s498] sm:$0xf] %vm1006, %v1002
        %1008 = vst.msk [vmem:[%s498 + $0x4] sm:$0xf] %vm1006, %v1003
        %v1009 = vld [vmem:[%s522] sm:$0xf]
        %v1010 = vld [vmem:[%s522 + $0x4] sm:$0xf]
        %v1011 = vunpack.c.l.bf16 %v1009
        %v1012 = vunpack.c.l.bf16 %v1010
        %v1013 = vsub.f32 1.0, %v989
        %v1014 = vsub.f32 1.0, %v991
        %v1015 = vmul.f32 %v1011, %v1013
        %v1016 = vmul.f32 %v1012, %v1014
        %v1017 = vpack.c.bf16 %v1016, %v1015
        %v1019 = vunpack.c.l.b16 %v1017
        %v1020 = vunpack.c.h.b16 %v1017
        %v1021 = vpack.c.b16 %v1019, %v1019
        %v1022 = vpack.c.b16 %v1020, %v1020
        %1025 = vst.msk [vmem:[%s505] sm:$0xf] %vm1006, %v1021
        %1026 = vst.msk [vmem:[%s505 + $0x4] sm:$0xf] %vm1006, %v1022
        %v1027 = vlaneseq
        %v1028 = vand.u32 %v1027, 127
        %v1029 = vand.u32 2147483647, %v977
        %v1030 = vand.u32 2147483647, %v979
        %v1031 = vsel %vm557, %v1029, 0.0
        %v1032 = vsel %vm557, %v1030, 0.0
        %v1033 = vadd.f32 %v1031, %v1032
        %1034 = vadd.xlane.f32.xlu0 %v1033
        %v1035 = vpop.xlane.xlu0 %1034
        %v1036 = vrot.slane %v1035, 4
        %v1037 = vadd.f32 %v1035, %v1036
        %v1038 = vrot.slane %v1037, 2
        %v1039 = vadd.f32 %v1037, %v1038
        %v1040 = vrot.slane %v1039, 1
        %v1041 = vadd.f32 %v1039, %v1040
        %s1042 = vtos %v1041
        %v1043 = vand.u32 2147483647, %v989
        %v1044 = vand.u32 2147483647, %v991
        %v1045 = vsel %vm557, %v1043, 0.0
        %v1046 = vsel %vm557, %v1044, 0.0
        %v1047 = vadd.f32 %v1045, %v1046
        %1048 = vadd.xlane.f32.xlu0 %v1047
        %v1049 = vpop.xlane.xlu0 %1048
        %v1050 = vrot.slane %v1049, 4
        %v1051 = vadd.f32 %v1049, %v1050
        %v1052 = vrot.slane %v1051, 2
        %v1053 = vadd.f32 %v1051, %v1052
        %v1054 = vrot.slane %v1053, 1
        %v1055 = vadd.f32 %v1053, %v1054
        %s1056 = vtos %v1055
        %vm1057 = vcmp.eq.s32.totalorder %v1028, 0
        %vm1058 = vcmp.eq.s32.totalorder %v1028, 1
        %v1059 = vstv %s1056
        %v1060 = vsel %vm1058, %v1059, 0.0
        %v1061 = vstv %s1042
        %v1062 = vsel %vm1057, %v1061, %v1060
        %1063 = vst [vmem:[%s511] sm:$0x1] %v1062
        %s1064 = sand.u32 %s251, 1
        %s1065 = scalar_lea.sflag [#allocation7], %s1064
        %s1066 = sand.u32 %s251, 1
        %s1067 = smul.addr %s1066, 8
        %s1068 = scalar_lea.vmem [#allocation13], %s1067
        %s1069 = sand.u32 %s34, 1
        %s1070 = scalar_lea.sflag [#allocation15], %s1069
        %s1071 = sand.u32 %s277, 1
        %s1072 = smul.addr %s1071, 8
        %s1073 = scalar_lea.vmem [#allocation14], %s1072
        %s1074 = sand.u32 %s34, 1
        %s1075 = scalar_lea.sflag [#allocation15], %s1074
        %s1076 = sand.u32 %s303, 1
        %s1077 = scalar_lea.vmem [#allocation16], %s1076
        // Predicated region
        $region80: #{tpu_custom_call.1} parent=55 // pred_check
          %p1078 = pneg %p261
        $region81: #{tpu_custom_call.1} parent=55 // pred_check_branch
          %1080 = sbr.rel (%p1078) target = $region83
        $region82: #{tpu_custom_call.1} parent=55 // pred_region
          %s1081 = smul.u32 2, %s34
          %s1083 = ssub.s32 128, 128
          %1084 = vsyncadd %s1065, %s1083
          %s1085 = smul.addr %s1081, 64
          %s1086 = scalar_lea.hbm %s9, %s1085
          %s1087 = sshll.u32 %s1068, 4
          %s1088 = int_to_ptr.vmem [resolvable:$true] %s1087
          %1093 = dma.vmem_to_hbm [thread:$0]  %s1088, 128, %s1086, %s1065, 64, 64, 4
        $region83: #{tpu_custom_call.1} parent=55 // pred_fallthru
          _
        // Predicated region
        $region84: #{tpu_custom_call.1} parent=55 // pred_check
          %p1094 = pneg %p287
        $region85: #{tpu_custom_call.1} parent=55 // pred_check_branch
          %1096 = sbr.rel (%p1094) target = $region87
        $region86: #{tpu_custom_call.1} parent=55 // pred_region
          %s1097 = smul.u32 2, %s34
          %s1099 = ssub.s32 128, 128
          %1100 = vsyncadd %s1070, %s1099
          %s1101 = smul.addr %s1097, 64
          %s1102 = scalar_lea.hbm %s10, %s1101
          %s1103 = sshll.u32 %s1073, 4
          %s1104 = int_to_ptr.vmem [resolvable:$true] %s1103
          %1109 = dma.vmem_to_hbm [thread:$0]  %s1104, 128, %s1102, %s1070, 64, 64, 4
        $region87: #{tpu_custom_call.1} parent=55 // pred_fallthru
          _
        // Predicated region
        $region88: #{tpu_custom_call.1} parent=55 // pred_check
          %p1110 = pneg %p313
        $region89: #{tpu_custom_call.1} parent=55 // pred_check_branch
          %1112 = sbr.rel (%p1110) target = $region91
        $region90: #{tpu_custom_call.1} parent=55 // pred_region
          %s1114 = ssub.s32 16, 16
          %1115 = vsyncadd %s1075, %s1114
          %s1116 = smul.addr %s34, 16
          %s1117 = scalar_lea.hbm %s11, %s1116
          %s1119 = sshll.u32 %s1077, 4
          %s1120 = int_to_ptr.vmem [resolvable:$true] %s1119
          %1122 = dma.vmem_to_hbm [thread:$0]  %s1120, 16, %s1117, %s1075
        $region91: #{tpu_custom_call.1} parent=55 // pred_fallthru
          _
      $region56: #{tpu_custom_call.1} parent=5 // pred_fallthru
        _
      %p1123 = scmp.le.s32.totalorder 2, %s29
      // Predicated region
      $region92: #{tpu_custom_call.1} parent=5 // pred_check
        %p1124 = pneg %p1123
      $region93: #{tpu_custom_call.1} parent=5 // pred_check_branch
        %1126 = sbr.rel (%p1124) target = $region95
      $region94: #{tpu_custom_call.1} parent=5 // pred_region
        %s1127 = ssub.s32 %s29, 2
        // Predicated region
        $region96: #{tpu_custom_call.1} parent=94 // pred_check
          %p1128 = pneg %p267
        $region97: #{tpu_custom_call.1} parent=94 // pred_check_branch
          %1130 = sbr.rel (%p1128) target = $region99
        $region98: #{tpu_custom_call.1} parent=94 // pred_region
          %s1131 = sand.u32 %s252, 1
          %s1132 = scalar_lea.sflag [#allocation7], %s1131
          %s1133 = sand.u32 %s252, 1
          %s1134 = smul.addr %s1133, 8
          %s1135 = scalar_lea.vmem [#allocation13], %s1134
          %1136 = dma.done %s1132, 128
        $region99: #{tpu_custom_call.1} parent=94 // pred_fallthru
          _
        // Predicated region
        $region100: #{tpu_custom_call.1} parent=94 // pred_check
          %p1137 = pneg %p293
        $region101: #{tpu_custom_call.1} parent=94 // pred_check_branch
          %1139 = sbr.rel (%p1137) target = $region103
        $region102: #{tpu_custom_call.1} parent=94 // pred_region
          %s1140 = sand.u32 %s35, 1
          %s1141 = scalar_lea.sflag [#allocation15], %s1140
          %s1142 = sand.u32 %s278, 1
          %s1143 = smul.addr %s1142, 8
          %s1144 = scalar_lea.vmem [#allocation14], %s1143
          %1145 = dma.done %s1141, 128
        $region103: #{tpu_custom_call.1} parent=94 // pred_fallthru
          _
        // Predicated region
        $region104: #{tpu_custom_call.1} parent=94 // pred_check
          %p1146 = pneg %p319
        $region105: #{tpu_custom_call.1} parent=94 // pred_check_branch
          %1148 = sbr.rel (%p1146) target = $region107
        $region106: #{tpu_custom_call.1} parent=94 // pred_region
          %s1149 = sand.u32 %s35, 1
          %s1150 = scalar_lea.sflag [#allocation15], %s1149
          %s1151 = sand.u32 %s304, 1
          %s1152 = scalar_lea.vmem [#allocation16], %s1151
          %1153 = dma.done %s1150, 16
        $region107: #{tpu_custom_call.1} parent=94 // pred_fallthru
          _
      $region95: #{tpu_custom_call.1} parent=5 // pred_fallthru
        _
    $region6: #{tpu_custom_call.1} parent=1 // loop_footer
      %s33 = sadd.s32 1, %s29
    $region7: #{tpu_custom_call.1} parent=1 // loop_footer_branch
      %28 = sbr.rel target = $region3
    $region8: #{tpu_custom_call.1} parent=1 // loop_exit
      _
    %1154 = vsyncpa [#allocation6], 1
    %s1155 = scalar_lea.sflag [#allocation6], 1
    %1156 = vsyncpa %s1155, 1
    %1157 = vsyncpa [#allocation9], 1
    %1158 = vsyncpa [#allocation12], 1
    %1159 = vsyncpa [#allocation7], 1
    %s1160 = scalar_lea.sflag [#allocation7], 1
    %1161 = vsyncpa %s1160, 1
    %1162 = vsyncpa [#allocation15], 1
    %s1163 = scalar_lea.sflag [#allocation15], 1
    %1164 = vsyncpa %s1163, 1

</llo_original>
